<compile_context>
chip_gen: v5e
topology: v5e:2x2
jax: 0.10.0
libtpu: 0.0.40
codegen_flags: <defaults>
</compile_context>

<pallas_src>
import functools
import math

import jax
import jax.numpy as jnp
from jax.experimental import pallas as pl
from jax.experimental.pallas import tpu as pltpu


# ----------------------------------------------------------------------------
# Fused kernel: full N-layer encoder stack for one batch block.
# grid = (batch_blocks, n_layers); the layer axis carries v in VMEM scratch.
# ----------------------------------------------------------------------------
def _encoder_stack_kernel(act_ref, x_ref, tgt_ref, src_ref, bias_ref,
                          c_ref, ct_ref, wq_ref, wk_ref, wv_ref, wo_ref,
                          w1_ref, w2_ref, vec_ref, b1_ref,
                          out_ref, v_state, *, b_blk, seq, d_pad, d_real):
    f32, bf16 = jnp.float32, jnp.bfloat16
    layer = pl.program_id(1)
    n_layers = pl.num_programs(1)
    tokens = b_blk * seq

    # first layer of this batch block: load the input into the carried state
    @pl.when(layer == 0)
    def _():
        v_state[...] = x_ref[...]

    v3 = v_state[...]                                   # (B_blk, S, Dp) f32
    v3b = v3.astype(bf16)

    # ---- low-rank spectral mix along the sequence axis: vf = (2/S) * C (C^T v) ----
    n_modes = c_ref.shape[1]
    cb = jnp.broadcast_to(c_ref[...][None], (b_blk, seq, n_modes))    # (B,S,M) bf16
    cbt = jnp.broadcast_to(ct_ref[...][None], (b_blk, n_modes, seq))  # (B,M,S) bf16
    tmp = jnp.einsum('bms,bsd->bmd', cbt, v3b, preferred_element_type=f32)
    vf = jnp.einsum('bsm,bmd->bsd', cb, tmp.astype(bf16),
                    preferred_element_type=f32) * (2.0 / seq)

    vf2 = vf.reshape(tokens, d_pad).astype(bf16)        # flatten tokens -> fill MXU rows

    vecs = vec_ref[...]                                 # (12, Dp) f32 constant vectors
    q_tv, q_b = vecs[0:1], vecs[1:2]
    k_tv, k_b = vecs[2:3], vecs[3:4]
    v_tv, v_b = vecs[4:5], vecs[5:6]
    bo, b2 = vecs[6:7], vecs[7:8]
    g1, be1 = vecs[8:9], vecs[9:10]
    g2, be2 = vecs[10:11], vecs[11:12]

    tgt_t = tgt_ref[...]                                # (B_blk, S, 1) f32
    src_t = src_ref[...]

    # ---- Q/K/V projections; rank-1 time-embedding constants rebuilt in-kernel ----
    q = jnp.dot(vf2, wq_ref[...],
                preferred_element_type=f32).reshape(b_blk, seq, d_pad)
    q = q + tgt_t * q_tv[None] + q_b[None]              # 1/sqrt(D) pre-folded into Wq/bq
    k = jnp.dot(vf2, wk_ref[...],
                preferred_element_type=f32).reshape(b_blk, seq, d_pad)
    k = k + src_t * k_tv[None] + k_b[None]
    val = jnp.dot(vf2, wv_ref[...],
                  preferred_element_type=f32).reshape(b_blk, seq, d_pad)
    val = val + src_t * v_tv[None] + v_b[None]

    # ---- attention with additive mask bias (scale already folded into q path) ----
    scores = jnp.einsum('bqd,bkd->bqk', q.astype(bf16), k.astype(bf16),
                        preferred_element_type=f32)
    scores = scores + bias_ref[...].astype(f32)         # (1,S,S) or (B_blk,S,S) bcast
    mx = jnp.max(scores, axis=-1, keepdims=True)
    e = jnp.exp(scores - mx)
    attn = e * pl.reciprocal(jnp.sum(e, axis=-1, keepdims=True), approx=True)

    ctx = jnp.einsum('bqk,bkd->bqd', attn.astype(bf16), val.astype(bf16),
                     preferred_element_type=f32)
    proj = jnp.dot(ctx.reshape(tokens, d_pad).astype(bf16), wo_ref[...],
                   preferred_element_type=f32) + bo

    # ---- residual (value stream) + LayerNorm 1 (pad-lane aware: real-D divisor) ----
    xr = val.reshape(tokens, d_pad) + proj
    inv_d = 1.0 / d_real
    mu = jnp.sum(xr, axis=-1, keepdims=True) * inv_d
    var = jnp.maximum(jnp.sum(xr * xr, axis=-1, keepdims=True) * inv_d - mu * mu, 0.0)
    x1 = (xr - mu) * jax.lax.rsqrt(var + 1e-6) * g1 + be1

    # ---- position-wise FFN with per-layer activation (0=relu, 1=gelu, 2=tanh) ----
    h = jnp.dot(x1.astype(bf16), w1_ref[...], preferred_element_type=f32) + b1_ref[...]
    act_id = act_ref[layer]
    w_relu = (act_id == 0).astype(f32)
    w_gelu = (act_id == 1).astype(f32)
    w_tanh = (act_id == 2).astype(f32)
    h = (w_relu * jnp.maximum(h, 0.0)
         + w_gelu * jax.nn.gelu(h, approximate=True)
         + w_tanh * jnp.tanh(h))
    ff = jnp.dot(h.astype(bf16), w2_ref[...], preferred_element_type=f32) + b2

    # ---- residual + LayerNorm 2 ----
    y = x1 + ff
    mu2 = jnp.sum(y, axis=-1, keepdims=True) * inv_d
    var2 = jnp.maximum(jnp.sum(y * y, axis=-1, keepdims=True) * inv_d - mu2 * mu2, 0.0)
    y = (y - mu2) * jax.lax.rsqrt(var2 + 1e-6) * g2 + be2

    y3 = y.reshape(b_blk, seq, d_pad)
    v_state[...] = y3                                   # carry to the next layer

    @pl.when(layer == n_layers - 1)
    def _():
        out_ref[...] = y3.astype(out_ref.dtype)


# ----------------------------------------------------------------------------
# Encoder_wave forward (wrapper: pads / folds constants, drives one pallas_call)
# ----------------------------------------------------------------------------
def _round_up(x, m):
    return (x + m - 1) // m * m


def encoder_wave_forward(x, mask, src_time, tgt_time, modes_in,
                         params, activations, *, b_blk=None, lane=128):
    f32, bf16 = jnp.float32, jnp.bfloat16
    B, S, D = x.shape
    n_layers = len(activations)
    ep, lp = params["embed"], params["layer"]
    Dff = lp["w1"].shape[1]
    Dp, Fp = _round_up(D, lane), _round_up(Dff, lane)
    if b_blk is None:
        b_blk = B
    assert B % b_blk == 0

    def pad2(w, r, c):
        return jnp.pad(w, ((0, r - w.shape[0]), (0, c - w.shape[1])))

    def padv(v, n):
        v = v.reshape(-1)
        return jnp.pad(v, (0, n - v.shape[0]))

    inv_scale = 1.0 / math.sqrt(D)   # attention scale folded into the q path

    # padded bf16 weights (pad lanes are zero so padded outputs stay exactly zero)
    wq_b = pad2(ep["wq"] * inv_scale, Dp, Dp).astype(bf16)
    wk_b = pad2(ep["wk"], Dp, Dp).astype(bf16)
    wv_b = pad2(ep["wv"], Dp, Dp).astype(bf16)
    wo_b = pad2(lp["wo"], Dp, Dp).astype(bf16)
    w1_b = pad2(lp["w1"], Dp, Fp).astype(bf16)
    w2_b = pad2(lp["w2"], Fp, Dp).astype(bf16)

    # rank-1 time-embedding constants, computed with the bf16-rounded weights so both
    # halves of the linear split q = (P@v)@Wq + (t*wt)@Wq + bq use identical precision
    wt_tgt = jnp.pad(params["w_time_tgt"], (0, Dp - D))
    wt_src = jnp.pad(params["w_time_src"], (0, Dp - D))
    q_tv = wt_tgt @ wq_b.astype(f32)
    k_tv = wt_src @ wk_b.astype(f32)
    v_tv = wt_src @ wv_b.astype(f32)

    # stack all (1, Dp) constant vectors into one small resident (12, Dp) slab
    vecs = jnp.stack([
        q_tv, padv(ep["bq"], Dp) * inv_scale,
        k_tv, padv(ep["bk"], Dp),
        v_tv, padv(ep["bv"], Dp),
        padv(lp["bo"], Dp), padv(lp["b2"], Dp),
        padv(lp["ln1_g"], Dp), padv(lp["ln1_b"], Dp),   # zero-padded gammas keep pads 0
        padv(lp["ln2_g"], Dp), padv(lp["ln2_b"], Dp),
    ], axis=0).astype(f32)
    b1_p = padv(lp["b1"], Fp).reshape(1, Fp)

    # low-rank spectral factor (truncated DCT-like basis keeping `modes_in` modes)
    s = jnp.arange(S, dtype=f32)[:, None]
    m = jnp.arange(modes_in, dtype=f32)[None, :]
    C = jnp.cos(jnp.pi * (s + 0.5) * m / S)              # (S, modes_in)
    c_bf, ct_bf = C.astype(bf16), C.T.astype(bf16)

    # additive attention bias: 0 keep / -1e9 masked; (1,S,S) is shared across batch
    bias = ((mask - 1.0) * 1e9).astype(bf16)
    bias_shared = bias.shape[0] == 1
    bias_blk = 1 if bias_shared else b_blk

    x_p = jnp.pad(x, ((0, 0), (0, 0), (0, Dp - D)))
    tgt_t = tgt_time.reshape(B, S, 1).astype(f32)
    src_t = src_time.reshape(B, S, 1).astype(f32)

    act_map = {"relu": 0, "gelu": 1, "tanh": 2}
    act_ids = jnp.array([act_map.get(a, 2) for a in activations], dtype=jnp.int32)

    # BlockSpecs: grid = (batch blocks, layers); all index_maps take the scalar-prefetch
    # ref as a trailing arg. Layer-invariant maps keep weights resident across layers.
    per_b3 = lambda last: pl.BlockSpec((b_blk, S, last), lambda b, l, a: (b, 0, 0))
    const2 = lambda r, c: pl.BlockSpec((r, c), lambda b, l, a: (0, 0))
    bias_spec = pl.BlockSpec(
        (bias_blk, S, S),
        (lambda b, l, a: (0, 0, 0)) if bias_shared else (lambda b, l, a: (b, 0, 0)))

    kernel = functools.partial(_encoder_stack_kernel,
                               b_blk=b_blk, seq=S, d_pad=Dp, d_real=D)

    grid_spec = pltpu.PrefetchScalarGridSpec(
        num_scalar_prefetch=1,
        grid=(B // b_blk, n_layers),
        in_specs=[per_b3(Dp), per_b3(1), per_b3(1), bias_spec,
                  const2(S, modes_in), const2(modes_in, S),
                  const2(Dp, Dp), const2(Dp, Dp), const2(Dp, Dp), const2(Dp, Dp),
                  const2(Dp, Fp), const2(Fp, Dp),
                  const2(12, Dp), const2(1, Fp)],
        out_specs=pl.BlockSpec((b_blk, S, Dp), lambda b, l, a: (b, 0, 0)),
        scratch_shapes=[pltpu.VMEM((b_blk, S, Dp), f32)])

    out = pl.pallas_call(
        kernel,
        out_shape=jax.ShapeDtypeStruct((B, S, Dp), x.dtype),
        grid_spec=grid_spec,
        compiler_params=pltpu.CompilerParams(
            dimension_semantics=("parallel", "arbitrary"),
            vmem_limit_bytes=48 * 1024 * 1024),
    )(act_ids, x_p, tgt_t, src_t, bias, c_bf, ct_bf,
      wq_b, wk_b, wv_b, wo_b, w1_b, w2_b, vecs, b1_p)

    return out[..., :D]


# ----------------------------------------------------------------------------
# Deterministic parameter init + run
# ----------------------------------------------------------------------------
def init_params(key, D, Dff):
    ks = jax.random.split(key, 8)
    sd = 1.0 / math.sqrt(D)
    sf = 1.0 / math.sqrt(Dff)
    embed = {
        "wq": jax.random.normal(ks[0], (D, D), jnp.float32) * sd,
        "wk": jax.random.normal(ks[1], (D, D), jnp.float32) * sd,
        "wv": jax.random.normal(ks[2], (D, D), jnp.float32) * sd,
        "bq": jnp.zeros((1, D), jnp.float32),
        "bk": jnp.zeros((1, D), jnp.float32),
        "bv": jnp.zeros((1, D), jnp.float32),
    }
    layer = {
        "wo": jax.random.normal(ks[3], (D, D), jnp.float32) * sd,
        "bo": jnp.zeros((1, D), jnp.float32),
        "w1": jax.random.normal(ks[4], (D, Dff), jnp.float32) * sd,
        "b1": jnp.zeros((1, Dff), jnp.float32),
        "w2": jax.random.normal(ks[5], (Dff, D), jnp.float32) * sf,
        "b2": jnp.zeros((1, D), jnp.float32),
        "ln1_g": jnp.ones((1, D), jnp.float32),
        "ln1_b": jnp.zeros((1, D), jnp.float32),
        "ln2_g": jnp.ones((1, D), jnp.float32),
        "ln2_b": jnp.zeros((1, D), jnp.float32),
    }
    return {
        "embed": embed,
        "layer": layer,
        "w_time_src": jax.random.normal(ks[6], (D,), jnp.float32) * 0.1,
        "w_time_tgt": jax.random.normal(ks[7], (D,), jnp.float32) * 0.1,
    }


if __name__ == "__main__":
    B, S, D, Dff = 2, 8, 32, 64
    N_layers = 2
    modes_in = 4
    activations = ["relu", "gelu"]          # per-layer activation list

    key = jax.random.PRNGKey(0)
    kx, kp = jax.random.split(key, 2)

    x = jax.random.normal(kx, (B, S, D), jnp.float32)
    mask = jnp.ones((1, S, S), jnp.float32)  # batch-invariant attend-all mask (shared)
    src_time = jnp.linspace(0.0, 1.0, S, dtype=jnp.float32)[None, :].repeat(B, 0)
    tgt_time = src_time + 0.5

    params = init_params(kp, D, Dff)

    out = encoder_wave_forward(x, mask, src_time, tgt_time, modes_in,
                               params, activations)
    out = jax.block_until_ready(out)

    assert out.shape == (B, S, D)
    assert bool(jnp.all(jnp.isfinite(out)))
    print("KERNEL_OK")
</pallas_src>

<mosaic_0001>
module attributes {stable_mosaic.version = 11 : i64} {
  func.func @_encoder_stack_kernel(%arg0: i32, %arg1: i32, %arg2: memref<2xi32, #tpu.memory_space<smem>>, %arg3: memref<2x8x128xf32, #tpu.memory_space<vmem>>, %arg4: memref<2x8x1xf32, #tpu.memory_space<vmem>>, %arg5: memref<2x8x1xf32, #tpu.memory_space<vmem>>, %arg6: memref<1x8x8xbf16, #tpu.memory_space<vmem>>, %arg7: memref<8x4xbf16, #tpu.memory_space<vmem>>, %arg8: memref<4x8xbf16, #tpu.memory_space<vmem>>, %arg9: memref<128x128xbf16, #tpu.memory_space<vmem>>, %arg10: memref<128x128xbf16, #tpu.memory_space<vmem>>, %arg11: memref<128x128xbf16, #tpu.memory_space<vmem>>, %arg12: memref<128x128xbf16, #tpu.memory_space<vmem>>, %arg13: memref<128x128xbf16, #tpu.memory_space<vmem>>, %arg14: memref<128x128xbf16, #tpu.memory_space<vmem>>, %arg15: memref<12x128xf32, #tpu.memory_space<vmem>>, %arg16: memref<1x128xf32, #tpu.memory_space<vmem>>, %arg17: memref<2x8x128xf32, #tpu.memory_space<vmem>>, %arg18: memref<2x8x128xf32, #tpu.memory_space<vmem>>) attributes {dimension_semantics = [#tpu.dimension_semantics<parallel>, #tpu.dimension_semantics<arbitrary>], iteration_bounds = array<i64: 1, 2>, scalar_prefetch = 1 : i64, scratch_operands = 1 : i64, tpu.core_type = #tpu.core_type<tc>, window_params = [{transform_indices = @transform_0, window_bounds = array<i64: 2, 8, 128>}, {transform_indices = @transform_1, window_bounds = array<i64: 2, 8, 1>}, {transform_indices = @transform_2, window_bounds = array<i64: 2, 8, 1>}, {pipeline_mode = #tpu.pipeline_mode<synchronous>, transform_indices = @transform_3, window_bounds = array<i64: 1, 8, 8>}, {pipeline_mode = #tpu.pipeline_mode<synchronous>, transform_indices = @transform_4, window_bounds = array<i64: 8, 4>}, {pipeline_mode = #tpu.pipeline_mode<synchronous>, transform_indices = @transform_5, window_bounds = array<i64: 4, 8>}, {pipeline_mode = #tpu.pipeline_mode<synchronous>, transform_indices = @transform_6, window_bounds = array<i64: 128, 128>}, {pipeline_mode = #tpu.pipeline_mode<synchronous>, transform_indices = @transform_7, window_bounds = array<i64: 128, 128>}, {pipeline_mode = #tpu.pipeline_mode<synchronous>, transform_indices = @transform_8, window_bounds = array<i64: 128, 128>}, {pipeline_mode = #tpu.pipeline_mode<synchronous>, transform_indices = @transform_9, window_bounds = array<i64: 128, 128>}, {pipeline_mode = #tpu.pipeline_mode<synchronous>, transform_indices = @transform_10, window_bounds = array<i64: 128, 128>}, {pipeline_mode = #tpu.pipeline_mode<synchronous>, transform_indices = @transform_11, window_bounds = array<i64: 128, 128>}, {pipeline_mode = #tpu.pipeline_mode<synchronous>, transform_indices = @transform_12, window_bounds = array<i64: 12, 128>}, {pipeline_mode = #tpu.pipeline_mode<synchronous>, transform_indices = @transform_13, window_bounds = array<i64: 1, 128>}, {transform_indices = @transform_14, window_bounds = array<i64: 2, 8, 128>}]} {
    %c0_i32 = arith.constant 0 : i32
    %0 = arith.cmpi eq, %arg1, %c0_i32 : i32
    %1 = arith.extui %0 : i1 to i32
    %c0_i32_0 = arith.constant 0 : i32
    %2 = arith.cmpi ne, %1, %c0_i32_0 : i32
    scf.if %2 {
      %c0_67 = arith.constant 0 : index
      %c0_68 = arith.constant 0 : index
      %c0_69 = arith.constant 0 : index
      %196 = vector.load %arg3[%c0_67, %c0_68, %c0_69] : memref<2x8x128xf32, #tpu.memory_space<vmem>>, vector<2x8x128xf32>
      %c0_70 = arith.constant 0 : index
      %c0_71 = arith.constant 0 : index
      %c0_72 = arith.constant 0 : index
      %197 = vector.load %arg18[%c0_70, %c0_71, %c0_72] : memref<2x8x128xf32, #tpu.memory_space<vmem>>, vector<2x8x128xf32>
      tpu.vector_store %arg18[%c0_70, %c0_71, %c0_72], %196 {strides = array<i32>} : memref<2x8x128xf32, #tpu.memory_space<vmem>>, vector<2x8x128xf32>,
    } else {
    }
    %c0 = arith.constant 0 : index
    %c0_1 = arith.constant 0 : index
    %c0_2 = arith.constant 0 : index
    %3 = vector.load %arg18[%c0, %c0_1, %c0_2] : memref<2x8x128xf32, #tpu.memory_space<vmem>>, vector<2x8x128xf32>
    %4 = arith.truncf %3 : vector<2x8x128xf32> to vector<2x8x128xbf16>
    %c0_3 = arith.constant 0 : index
    %c0_4 = arith.constant 0 : index
    %5 = vector.load %arg7[%c0_3, %c0_4] : memref<8x4xbf16, #tpu.memory_space<vmem>>, vector<8x4xbf16>
    %6 = vector.shape_cast %5 : vector<8x4xbf16> to vector<1x8x4xbf16>
    %7 = vector.shape_cast %6 : vector<1x8x4xbf16> to vector<1x8x4xbf16>
    %8 = vector.broadcast %7 : vector<1x8x4xbf16> to vector<2x8x4xbf16>
    %c0_5 = arith.constant 0 : index
    %c0_6 = arith.constant 0 : index
    %9 = vector.load %arg8[%c0_5, %c0_6] : memref<4x8xbf16, #tpu.memory_space<vmem>>, vector<4x8xbf16>
    %10 = vector.shape_cast %9 : vector<4x8xbf16> to vector<1x4x8xbf16>
    %11 = vector.shape_cast %10 : vector<1x4x8xbf16> to vector<1x4x8xbf16>
    %12 = vector.broadcast %11 : vector<1x4x8xbf16> to vector<2x4x8xbf16>
    "tpu.trace_start"() <{level = 10 : i32, message = "bms,bsd->bmd"}> : () -> ()
    %cst = arith.constant dense<0.000000e+00> : vector<2x4x128xf32>
    %13 = tpu.matmul %12, %4, %cst {dimension_numbers = #tpu.dot_dimension_numbers<[2], [1], [1], [2], [0, 0, 0, 1, 1, 2], [0], [0]>} : vector<2x4x8xbf16>, vector<2x8x128xbf16>, vector<2x4x128xf32> -> vector<2x4x128xf32>
    "tpu.trace_stop"() : () -> ()
    %14 = arith.truncf %13 : vector<2x4x128xf32> to vector<2x4x128xbf16>
    "tpu.trace_start"() <{level = 10 : i32, message = "bsm,bmd->bsd"}> : () -> ()
    %cst_7 = arith.constant dense<0.000000e+00> : vector<2x8x128xf32>
    %15 = tpu.matmul %8, %14, %cst_7 {dimension_numbers = #tpu.dot_dimension_numbers<[2], [1], [1], [2], [0, 0, 0, 1, 1, 2], [0], [0]>} : vector<2x8x4xbf16>, vector<2x4x128xbf16>, vector<2x8x128xf32> -> vector<2x8x128xf32>
    "tpu.trace_stop"() : () -> ()
    %cst_8 = arith.constant 2.500000e-01 : f32
    %16 = vector.broadcast %cst_8 : f32 to vector<2x8x128xf32>
    %17 = arith.mulf %15, %16 : vector<2x8x128xf32>
    %18 = vector.shape_cast %17 : vector<2x8x128xf32> to vector<16x128xf32>
    %19 = arith.truncf %18 : vector<16x128xf32> to vector<16x128xbf16>
    %c0_9 = arith.constant 0 : index
    %c0_10 = arith.constant 0 : index
    %20 = vector.load %arg15[%c0_9, %c0_10] : memref<12x128xf32, #tpu.memory_space<vmem>>, vector<12x128xf32>
    %21 = vector.extract_strided_slice %20 {offsets = [0, 0], sizes = [1, 128], strides = [1, 1]} : vector<12x128xf32> to vector<1x128xf32>
    %22 = vector.extract_strided_slice %20 {offsets = [1, 0], sizes = [1, 128], strides = [1, 1]} : vector<12x128xf32> to vector<1x128xf32>
    %23 = vector.extract_strided_slice %20 {offsets = [2, 0], sizes = [1, 128], strides = [1, 1]} : vector<12x128xf32> to vector<1x128xf32>
    %24 = vector.extract_strided_slice %20 {offsets = [3, 0], sizes = [1, 128], strides = [1, 1]} : vector<12x128xf32> to vector<1x128xf32>
    %25 = vector.extract_strided_slice %20 {offsets = [4, 0], sizes = [1, 128], strides = [1, 1]} : vector<12x128xf32> to vector<1x128xf32>
    %26 = vector.extract_strided_slice %20 {offsets = [5, 0], sizes = [1, 128], strides = [1, 1]} : vector<12x128xf32> to vector<1x128xf32>
    %27 = vector.extract_strided_slice %20 {offsets = [6, 0], sizes = [1, 128], strides = [1, 1]} : vector<12x128xf32> to vector<1x128xf32>
    %28 = vector.extract_strided_slice %20 {offsets = [7, 0], sizes = [1, 128], strides = [1, 1]} : vector<12x128xf32> to vector<1x128xf32>
    %29 = vector.extract_strided_slice %20 {offsets = [8, 0], sizes = [1, 128], strides = [1, 1]} : vector<12x128xf32> to vector<1x128xf32>
    %30 = vector.extract_strided_slice %20 {offsets = [9, 0], sizes = [1, 128], strides = [1, 1]} : vector<12x128xf32> to vector<1x128xf32>
    %31 = vector.extract_strided_slice %20 {offsets = [10, 0], sizes = [1, 128], strides = [1, 1]} : vector<12x128xf32> to vector<1x128xf32>
    %32 = vector.extract_strided_slice %20 {offsets = [11, 0], sizes = [1, 128], strides = [1, 1]} : vector<12x128xf32> to vector<1x128xf32>
    %c0_11 = arith.constant 0 : index
    %c0_12 = arith.constant 0 : index
    %c0_13 = arith.constant 0 : index
    %33 = vector.load %arg4[%c0_11, %c0_12, %c0_13] : memref<2x8x1xf32, #tpu.memory_space<vmem>>, vector<2x8x1xf32>
    %c0_14 = arith.constant 0 : index
    %c0_15 = arith.constant 0 : index
    %c0_16 = arith.constant 0 : index
    %34 = vector.load %arg5[%c0_14, %c0_15, %c0_16] : memref<2x8x1xf32, #tpu.memory_space<vmem>>, vector<2x8x1xf32>
    %c0_17 = arith.constant 0 : index
    %c0_18 = arith.constant 0 : index
    %35 = vector.load %arg9[%c0_17, %c0_18] : memref<128x128xbf16, #tpu.memory_space<vmem>>, vector<128x128xbf16>
    %cst_19 = arith.constant dense<0.000000e+00> : vector<16x128xf32>
    %36 = tpu.matmul %19, %35, %cst_19 {dimension_numbers = #tpu.dot_dimension_numbers<[1], [0], [0], [1], [0, 0, 1, 1], [], []>} : vector<16x128xbf16>, vector<128x128xbf16>, vector<16x128xf32> -> vector<16x128xf32>
    %37 = vector.shape_cast %36 : vector<16x128xf32> to vector<2x8x128xf32>
    %38 = vector.shape_cast %21 : vector<1x128xf32> to vector<1x1x128xf32>
    %39 = vector.broadcast %33 : vector<2x8x1xf32> to vector<2x8x128xf32>
    %40 = vector.broadcast %38 : vector<1x1x128xf32> to vector<2x8x128xf32>
    %41 = arith.mulf %39, %40 : vector<2x8x128xf32>
    %42 = arith.addf %37, %41 : vector<2x8x128xf32>
    %43 = vector.shape_cast %22 : vector<1x128xf32> to vector<1x1x128xf32>
    %44 = vector.broadcast %43 : vector<1x1x128xf32> to vector<2x8x128xf32>
    %45 = arith.addf %42, %44 : vector<2x8x128xf32>
    %c0_20 = arith.constant 0 : index
    %c0_21 = arith.constant 0 : index
    %46 = vector.load %arg10[%c0_20, %c0_21] : memref<128x128xbf16, #tpu.memory_space<vmem>>, vector<128x128xbf16>
    %cst_22 = arith.constant dense<0.000000e+00> : vector<16x128xf32>
    %47 = tpu.matmul %19, %46, %cst_22 {dimension_numbers = #tpu.dot_dimension_numbers<[1], [0], [0], [1], [0, 0, 1, 1], [], []>} : vector<16x128xbf16>, vector<128x128xbf16>, vector<16x128xf32> -> vector<16x128xf32>
    %48 = vector.shape_cast %47 : vector<16x128xf32> to vector<2x8x128xf32>
    %49 = vector.shape_cast %23 : vector<1x128xf32> to vector<1x1x128xf32>
    %50 = vector.broadcast %34 : vector<2x8x1xf32> to vector<2x8x128xf32>
    %51 = vector.broadcast %49 : vector<1x1x128xf32> to vector<2x8x128xf32>
    %52 = arith.mulf %50, %51 : vector<2x8x128xf32>
    %53 = arith.addf %48, %52 : vector<2x8x128xf32>
    %54 = vector.shape_cast %24 : vector<1x128xf32> to vector<1x1x128xf32>
    %55 = vector.broadcast %54 : vector<1x1x128xf32> to vector<2x8x128xf32>
    %56 = arith.addf %53, %55 : vector<2x8x128xf32>
    %c0_23 = arith.constant 0 : index
    %c0_24 = arith.constant 0 : index
    %57 = vector.load %arg11[%c0_23, %c0_24] : memref<128x128xbf16, #tpu.memory_space<vmem>>, vector<128x128xbf16>
    %cst_25 = arith.constant dense<0.000000e+00> : vector<16x128xf32>
    %58 = tpu.matmul %19, %57, %cst_25 {dimension_numbers = #tpu.dot_dimension_numbers<[1], [0], [0], [1], [0, 0, 1, 1], [], []>} : vector<16x128xbf16>, vector<128x128xbf16>, vector<16x128xf32> -> vector<16x128xf32>
    %59 = vector.shape_cast %58 : vector<16x128xf32> to vector<2x8x128xf32>
    %60 = vector.shape_cast %25 : vector<1x128xf32> to vector<1x1x128xf32>
    %61 = vector.broadcast %34 : vector<2x8x1xf32> to vector<2x8x128xf32>
    %62 = vector.broadcast %60 : vector<1x1x128xf32> to vector<2x8x128xf32>
    %63 = arith.mulf %61, %62 : vector<2x8x128xf32>
    %64 = arith.addf %59, %63 : vector<2x8x128xf32>
    %65 = vector.shape_cast %26 : vector<1x128xf32> to vector<1x1x128xf32>
    %66 = vector.broadcast %65 : vector<1x1x128xf32> to vector<2x8x128xf32>
    %67 = arith.addf %64, %66 : vector<2x8x128xf32>
    %68 = arith.truncf %45 : vector<2x8x128xf32> to vector<2x8x128xbf16>
    %69 = arith.truncf %56 : vector<2x8x128xf32> to vector<2x8x128xbf16>
    "tpu.trace_start"() <{level = 10 : i32, message = "bqd,bkd->bqk"}> : () -> ()
    %cst_26 = arith.constant dense<0.000000e+00> : vector<2x8x8xf32>
    %70 = tpu.matmul %68, %69, %cst_26 {dimension_numbers = #tpu.dot_dimension_numbers<[2], [2], [1], [1], [0, 0, 0, 1, 1, 1], [0], [0]>} : vector<2x8x128xbf16>, vector<2x8x128xbf16>, vector<2x8x8xf32> -> vector<2x8x8xf32>
    "tpu.trace_stop"() : () -> ()
    %c0_27 = arith.constant 0 : index
    %c0_28 = arith.constant 0 : index
    %c0_29 = arith.constant 0 : index
    %71 = vector.load %arg6[%c0_27, %c0_28, %c0_29] : memref<1x8x8xbf16, #tpu.memory_space<vmem>>, vector<1x8x8xbf16>
    %72 = arith.extf %71 : vector<1x8x8xbf16> to vector<1x8x8xf32>
    %73 = vector.broadcast %72 : vector<1x8x8xf32> to vector<2x8x8xf32>
    %74 = arith.addf %70, %73 : vector<2x8x8xf32>
    %cst_30 = arith.constant dense<0xFF800000> : vector<2x8xf32>
    %75 = vector.multi_reduction <maximumf>, %74, %cst_30 [2] : vector<2x8x8xf32> to vector<2x8xf32>
    %76 = vector.shape_cast %75 : vector<2x8xf32> to vector<2x8x1xf32>
    %77 = vector.broadcast %76 : vector<2x8x1xf32> to vector<2x8x8xf32>
    %78 = arith.subf %74, %77 : vector<2x8x8xf32>
    %79 = math.exp %78 : vector<2x8x8xf32>
    %cst_31 = arith.constant dense<0.000000e+00> : vector<2x8xf32>
    %80 = vector.multi_reduction <add>, %79, %cst_31 [2] : vector<2x8x8xf32> to vector<2x8xf32>
    %81 = vector.shape_cast %80 : vector<2x8xf32> to vector<2x8x1xf32>
    %82 = tpu.reciprocal %81 {approx = true} : vector<2x8x1xf32> -> vector<2x8x1xf32>
    %83 = vector.broadcast %82 : vector<2x8x1xf32> to vector<2x8x8xf32>
    %84 = arith.mulf %79, %83 : vector<2x8x8xf32>
    %85 = arith.truncf %84 : vector<2x8x8xf32> to vector<2x8x8xbf16>
    %86 = arith.truncf %67 : vector<2x8x128xf32> to vector<2x8x128xbf16>
    "tpu.trace_start"() <{level = 10 : i32, message = "bqk,bkd->bqd"}> : () -> ()
    %cst_32 = arith.constant dense<0.000000e+00> : vector<2x8x128xf32>
    %87 = tpu.matmul %85, %86, %cst_32 {dimension_numbers = #tpu.dot_dimension_numbers<[2], [1], [1], [2], [0, 0, 0, 1, 1, 2], [0], [0]>} : vector<2x8x8xbf16>, vector<2x8x128xbf16>, vector<2x8x128xf32> -> vector<2x8x128xf32>
    "tpu.trace_stop"() : () -> ()
    %88 = vector.shape_cast %87 : vector<2x8x128xf32> to vector<16x128xf32>
    %89 = arith.truncf %88 : vector<16x128xf32> to vector<16x128xbf16>
    %c0_33 = arith.constant 0 : index
    %c0_34 = arith.constant 0 : index
    %90 = vector.load %arg12[%c0_33, %c0_34] : memref<128x128xbf16, #tpu.memory_space<vmem>>, vector<128x128xbf16>
    %cst_35 = arith.constant dense<0.000000e+00> : vector<16x128xf32>
    %91 = tpu.matmul %89, %90, %cst_35 {dimension_numbers = #tpu.dot_dimension_numbers<[1], [0], [0], [1], [0, 0, 1, 1], [], []>} : vector<16x128xbf16>, vector<128x128xbf16>, vector<16x128xf32> -> vector<16x128xf32>
    %92 = vector.broadcast %27 : vector<1x128xf32> to vector<16x128xf32>
    %93 = arith.addf %91, %92 : vector<16x128xf32>
    %94 = vector.shape_cast %67 : vector<2x8x128xf32> to vector<16x128xf32>
    %95 = arith.addf %94, %93 : vector<16x128xf32>
    %cst_36 = arith.constant dense<0.000000e+00> : vector<16xf32>
    %96 = vector.multi_reduction <add>, %95, %cst_36 [1] : vector<16x128xf32> to vector<16xf32>
    %97 = vector.shape_cast %96 : vector<16xf32> to vector<16x1xf32>
    %cst_37 = arith.constant 3.125000e-02 : f32
    %98 = vector.broadcast %cst_37 : f32 to vector<16x1xf32>
    %99 = arith.mulf %97, %98 : vector<16x1xf32>
    %100 = arith.mulf %95, %95 : vector<16x128xf32>
    %cst_38 = arith.constant dense<0.000000e+00> : vector<16xf32>
    %101 = vector.multi_reduction <add>, %100, %cst_38 [1] : vector<16x128xf32> to vector<16xf32>
    %102 = vector.shape_cast %101 : vector<16xf32> to vector<16x1xf32>
    %cst_39 = arith.constant 3.125000e-02 : f32
    %103 = vector.broadcast %cst_39 : f32 to vector<16x1xf32>
    %104 = arith.mulf %102, %103 : vector<16x1xf32>
    %105 = arith.mulf %99, %99 : vector<16x1xf32>
    %106 = arith.subf %104, %105 : vector<16x1xf32>
    %cst_40 = arith.constant 0.000000e+00 : f32
    %107 = vector.broadcast %cst_40 : f32 to vector<16x1xf32>
    %108 = arith.maximumf %106, %107 : vector<16x1xf32>
    %109 = vector.broadcast %99 : vector<16x1xf32> to vector<16x128xf32>
    %110 = arith.subf %95, %109 : vector<16x128xf32>
    %cst_41 = arith.constant 9.99999997E-7 : f32
    %111 = vector.broadcast %cst_41 : f32 to vector<16x1xf32>
    %112 = arith.addf %108, %111 : vector<16x1xf32>
    %113 = math.rsqrt %112 : vector<16x1xf32>
    %114 = vector.broadcast %113 : vector<16x1xf32> to vector<16x128xf32>
    %115 = arith.mulf %110, %114 : vector<16x128xf32>
    %116 = vector.broadcast %29 : vector<1x128xf32> to vector<16x128xf32>
    %117 = arith.mulf %115, %116 : vector<16x128xf32>
    %118 = vector.broadcast %30 : vector<1x128xf32> to vector<16x128xf32>
    %119 = arith.addf %117, %118 : vector<16x128xf32>
    %120 = arith.truncf %119 : vector<16x128xf32> to vector<16x128xbf16>
    %c0_42 = arith.constant 0 : index
    %c0_43 = arith.constant 0 : index
    %121 = vector.load %arg13[%c0_42, %c0_43] : memref<128x128xbf16, #tpu.memory_space<vmem>>, vector<128x128xbf16>
    %cst_44 = arith.constant dense<0.000000e+00> : vector<16x128xf32>
    %122 = tpu.matmul %120, %121, %cst_44 {dimension_numbers = #tpu.dot_dimension_numbers<[1], [0], [0], [1], [0, 0, 1, 1], [], []>} : vector<16x128xbf16>, vector<128x128xbf16>, vector<16x128xf32> -> vector<16x128xf32>
    %c0_45 = arith.constant 0 : index
    %c0_46 = arith.constant 0 : index
    %123 = vector.load %arg16[%c0_45, %c0_46] : memref<1x128xf32, #tpu.memory_space<vmem>>, vector<1x128xf32>
    %124 = vector.broadcast %123 : vector<1x128xf32> to vector<16x128xf32>
    %125 = arith.addf %122, %124 : vector<16x128xf32>
    %126 = arith.index_cast %arg1 : i32 to index
    %127 = memref.load %arg2[%126] : memref<2xi32, #tpu.memory_space<smem>>
    %c0_i32_47 = arith.constant 0 : i32
    %128 = arith.cmpi eq, %127, %c0_i32_47 : i32
    %129 = arith.extui %128 : i1 to i32
    %130 = arith.sitofp %129 : i32 to f32
    %c1_i32 = arith.constant 1 : i32
    %131 = arith.cmpi eq, %127, %c1_i32 : i32
    %132 = arith.extui %131 : i1 to i32
    %133 = arith.sitofp %132 : i32 to f32
    %c2_i32 = arith.constant 2 : i32
    %134 = arith.cmpi eq, %127, %c2_i32 : i32
    %135 = arith.extui %134 : i1 to i32
    %136 = arith.sitofp %135 : i32 to f32
    %cst_48 = arith.constant 0.000000e+00 : f32
    %137 = vector.broadcast %cst_48 : f32 to vector<16x128xf32>
    %138 = arith.maximumf %125, %137 : vector<16x128xf32>
    %139 = vector.broadcast %130 : f32 to vector<16x128xf32>
    %140 = arith.mulf %139, %138 : vector<16x128xf32>
    %141 = arith.mulf %125, %125 : vector<16x128xf32>
    %142 = arith.mulf %125, %141 : vector<16x128xf32>
    %cst_49 = arith.constant 4.471500e-02 : f32
    %143 = vector.broadcast %cst_49 : f32 to vector<16x128xf32>
    %144 = arith.mulf %143, %142 : vector<16x128xf32>
    %145 = arith.addf %125, %144 : vector<16x128xf32>
    %cst_50 = arith.constant 0.797884583 : f32
    %146 = vector.broadcast %cst_50 : f32 to vector<16x128xf32>
    %147 = arith.mulf %146, %145 : vector<16x128xf32>
    %148 = math.tanh %147 : vector<16x128xf32>
    %cst_51 = arith.constant 1.000000e+00 : f32
    %149 = vector.broadcast %cst_51 : f32 to vector<16x128xf32>
    %150 = arith.addf %149, %148 : vector<16x128xf32>
    %cst_52 = arith.constant 5.000000e-01 : f32
    %151 = vector.broadcast %cst_52 : f32 to vector<16x128xf32>
    %152 = arith.mulf %151, %150 : vector<16x128xf32>
    %153 = arith.mulf %125, %152 : vector<16x128xf32>
    %154 = vector.broadcast %133 : f32 to vector<16x128xf32>
    %155 = arith.mulf %154, %153 : vector<16x128xf32>
    %156 = arith.addf %140, %155 : vector<16x128xf32>
    %157 = math.tanh %125 : vector<16x128xf32>
    %158 = vector.broadcast %136 : f32 to vector<16x128xf32>
    %159 = arith.mulf %158, %157 : vector<16x128xf32>
    %160 = arith.addf %156, %159 : vector<16x128xf32>
    %161 = arith.truncf %160 : vector<16x128xf32> to vector<16x128xbf16>
    %c0_53 = arith.constant 0 : index
    %c0_54 = arith.constant 0 : index
    %162 = vector.load %arg14[%c0_53, %c0_54] : memref<128x128xbf16, #tpu.memory_space<vmem>>, vector<128x128xbf16>
    %cst_55 = arith.constant dense<0.000000e+00> : vector<16x128xf32>
    %163 = tpu.matmul %161, %162, %cst_55 {dimension_numbers = #tpu.dot_dimension_numbers<[1], [0], [0], [1], [0, 0, 1, 1], [], []>} : vector<16x128xbf16>, vector<128x128xbf16>, vector<16x128xf32> -> vector<16x128xf32>
    %164 = vector.broadcast %28 : vector<1x128xf32> to vector<16x128xf32>
    %165 = arith.addf %163, %164 : vector<16x128xf32>
    %166 = arith.addf %119, %165 : vector<16x128xf32>
    %cst_56 = arith.constant dense<0.000000e+00> : vector<16xf32>
    %167 = vector.multi_reduction <add>, %166, %cst_56 [1] : vector<16x128xf32> to vector<16xf32>
    %168 = vector.shape_cast %167 : vector<16xf32> to vector<16x1xf32>
    %cst_57 = arith.constant 3.125000e-02 : f32
    %169 = vector.broadcast %cst_57 : f32 to vector<16x1xf32>
    %170 = arith.mulf %168, %169 : vector<16x1xf32>
    %171 = arith.mulf %166, %166 : vector<16x128xf32>
    %cst_58 = arith.constant dense<0.000000e+00> : vector<16xf32>
    %172 = vector.multi_reduction <add>, %171, %cst_58 [1] : vector<16x128xf32> to vector<16xf32>
    %173 = vector.shape_cast %172 : vector<16xf32> to vector<16x1xf32>
    %cst_59 = arith.constant 3.125000e-02 : f32
    %174 = vector.broadcast %cst_59 : f32 to vector<16x1xf32>
    %175 = arith.mulf %173, %174 : vector<16x1xf32>
    %176 = arith.mulf %170, %170 : vector<16x1xf32>
    %177 = arith.subf %175, %176 : vector<16x1xf32>
    %cst_60 = arith.constant 0.000000e+00 : f32
    %178 = vector.broadcast %cst_60 : f32 to vector<16x1xf32>
    %179 = arith.maximumf %177, %178 : vector<16x1xf32>
    %180 = vector.broadcast %170 : vector<16x1xf32> to vector<16x128xf32>
    %181 = arith.subf %166, %180 : vector<16x128xf32>
    %cst_61 = arith.constant 9.99999997E-7 : f32
    %182 = vector.broadcast %cst_61 : f32 to vector<16x1xf32>
    %183 = arith.addf %179, %182 : vector<16x1xf32>
    %184 = math.rsqrt %183 : vector<16x1xf32>
    %185 = vector.broadcast %184 : vector<16x1xf32> to vector<16x128xf32>
    %186 = arith.mulf %181, %185 : vector<16x128xf32>
    %187 = vector.broadcast %31 : vector<1x128xf32> to vector<16x128xf32>
    %188 = arith.mulf %186, %187 : vector<16x128xf32>
    %189 = vector.broadcast %32 : vector<1x128xf32> to vector<16x128xf32>
    %190 = arith.addf %188, %189 : vector<16x128xf32>
    %191 = vector.shape_cast %190 : vector<16x128xf32> to vector<2x8x128xf32>
    %c0_62 = arith.constant 0 : index
    %c0_63 = arith.constant 0 : index
    %c0_64 = arith.constant 0 : index
    %192 = vector.load %arg18[%c0_62, %c0_63, %c0_64] : memref<2x8x128xf32, #tpu.memory_space<vmem>>, vector<2x8x128xf32>
    tpu.vector_store %arg18[%c0_62, %c0_63, %c0_64], %191 {strides = array<i32>} : memref<2x8x128xf32, #tpu.memory_space<vmem>>, vector<2x8x128xf32>,
    %c1_i32_65 = arith.constant 1 : i32
    %193 = arith.cmpi eq, %arg1, %c1_i32_65 : i32
    %194 = arith.extui %193 : i1 to i32
    %c0_i32_66 = arith.constant 0 : i32
    %195 = arith.cmpi ne, %194, %c0_i32_66 : i32
    scf.if %195 {
      %c0_67 = arith.constant 0 : index
      %c0_68 = arith.constant 0 : index
      %c0_69 = arith.constant 0 : index
      %196 = vector.load %arg17[%c0_67, %c0_68, %c0_69] : memref<2x8x128xf32, #tpu.memory_space<vmem>>, vector<2x8x128xf32>
      tpu.vector_store %arg17[%c0_67, %c0_68, %c0_69], %191 {strides = array<i32>} : memref<2x8x128xf32, #tpu.memory_space<vmem>>, vector<2x8x128xf32>,
    } else {
    }
    return
  }
  func.func @transform_0(%arg0: i32, %arg1: i32, %arg2: memref<2xi32, #tpu.memory_space<smem>>) -> (i32, i32, i32) {
    %c0_i32 = arith.constant 0 : i32
    %c0_i32_0 = arith.constant 0 : i32
    %c0_i32_1 = arith.constant 0 : i32
    return %arg0, %c0_i32, %c0_i32_0 : i32, i32, i32
  }
  func.func @transform_1(%arg0: i32, %arg1: i32, %arg2: memref<2xi32, #tpu.memory_space<smem>>) -> (i32, i32, i32) {
    %c0_i32 = arith.constant 0 : i32
    %c0_i32_0 = arith.constant 0 : i32
    %c0_i32_1 = arith.constant 0 : i32
    return %arg0, %c0_i32, %c0_i32_0 : i32, i32, i32
  }
  func.func @transform_2(%arg0: i32, %arg1: i32, %arg2: memref<2xi32, #tpu.memory_space<smem>>) -> (i32, i32, i32) {
    %c0_i32 = arith.constant 0 : i32
    %c0_i32_0 = arith.constant 0 : i32
    %c0_i32_1 = arith.constant 0 : i32
    return %arg0, %c0_i32, %c0_i32_0 : i32, i32, i32
  }
  func.func @transform_3(%arg0: i32, %arg1: i32, %arg2: memref<2xi32, #tpu.memory_space<smem>>) -> (i32, i32, i32) {
    %c0_i32 = arith.constant 0 : i32
    %c0_i32_0 = arith.constant 0 : i32
    %c0_i32_1 = arith.constant 0 : i32
    %c0_i32_2 = arith.constant 0 : i32
    return %c0_i32, %c0_i32_0, %c0_i32_1 : i32, i32, i32
  }
  func.func @transform_4(%arg0: i32, %arg1: i32, %arg2: memref<2xi32, #tpu.memory_space<smem>>) -> (i32, i32) {
    %c0_i32 = arith.constant 0 : i32
    %c0_i32_0 = arith.constant 0 : i32
    %c0_i32_1 = arith.constant 0 : i32
    return %c0_i32, %c0_i32_0 : i32, i32
  }
  func.func @transform_5(%arg0: i32, %arg1: i32, %arg2: memref<2xi32, #tpu.memory_space<smem>>) -> (i32, i32) {
    %c0_i32 = arith.constant 0 : i32
    %c0_i32_0 = arith.constant 0 : i32
    %c0_i32_1 = arith.constant 0 : i32
    return %c0_i32, %c0_i32_0 : i32, i32
  }
  func.func @transform_6(%arg0: i32, %arg1: i32, %arg2: memref<2xi32, #tpu.memory_space<smem>>) -> (i32, i32) {
    %c0_i32 = arith.constant 0 : i32
    %c0_i32_0 = arith.constant 0 : i32
    %c0_i32_1 = arith.constant 0 : i32
    return %c0_i32, %c0_i32_0 : i32, i32
  }
  func.func @transform_7(%arg0: i32, %arg1: i32, %arg2: memref<2xi32, #tpu.memory_space<smem>>) -> (i32, i32) {
    %c0_i32 = arith.constant 0 : i32
    %c0_i32_0 = arith.constant 0 : i32
    %c0_i32_1 = arith.constant 0 : i32
    return %c0_i32, %c0_i32_0 : i32, i32
  }
  func.func @transform_8(%arg0: i32, %arg1: i32, %arg2: memref<2xi32, #tpu.memory_space<smem>>) -> (i32, i32) {
    %c0_i32 = arith.constant 0 : i32
    %c0_i32_0 = arith.constant 0 : i32
    %c0_i32_1 = arith.constant 0 : i32
    return %c0_i32, %c0_i32_0 : i32, i32
  }
  func.func @transform_9(%arg0: i32, %arg1: i32, %arg2: memref<2xi32, #tpu.memory_space<smem>>) -> (i32, i32) {
    %c0_i32 = arith.constant 0 : i32
    %c0_i32_0 = arith.constant 0 : i32
    %c0_i32_1 = arith.constant 0 : i32
    return %c0_i32, %c0_i32_0 : i32, i32
  }
  func.func @transform_10(%arg0: i32, %arg1: i32, %arg2: memref<2xi32, #tpu.memory_space<smem>>) -> (i32, i32) {
    %c0_i32 = arith.constant 0 : i32
    %c0_i32_0 = arith.constant 0 : i32
    %c0_i32_1 = arith.constant 0 : i32
    return %c0_i32, %c0_i32_0 : i32, i32
  }
  func.func @transform_11(%arg0: i32, %arg1: i32, %arg2: memref<2xi32, #tpu.memory_space<smem>>) -> (i32, i32) {
    %c0_i32 = arith.constant 0 : i32
    %c0_i32_0 = arith.constant 0 : i32
    %c0_i32_1 = arith.constant 0 : i32
    return %c0_i32, %c0_i32_0 : i32, i32
  }
  func.func @transform_12(%arg0: i32, %arg1: i32, %arg2: memref<2xi32, #tpu.memory_space<smem>>) -> (i32, i32) {
    %c0_i32 = arith.constant 0 : i32
    %c0_i32_0 = arith.constant 0 : i32
    %c0_i32_1 = arith.constant 0 : i32
    return %c0_i32, %c0_i32_0 : i32, i32
  }
  func.func @transform_13(%arg0: i32, %arg1: i32, %arg2: memref<2xi32, #tpu.memory_space<smem>>) -> (i32, i32) {
    %c0_i32 = arith.constant 0 : i32
    %c0_i32_0 = arith.constant 0 : i32
    %c0_i32_1 = arith.constant 0 : i32
    return %c0_i32, %c0_i32_0 : i32, i32
  }
  func.func @transform_14(%arg0: i32, %arg1: i32, %arg2: memref<2xi32, #tpu.memory_space<smem>>) -> (i32, i32, i32) {
    %c0_i32 = arith.constant 0 : i32
    %c0_i32_0 = arith.constant 0 : i32
    %c0_i32_1 = arith.constant 0 : i32
    return %arg0, %c0_i32, %c0_i32_0 : i32, i32, i32
  }
}

</mosaic_0001>

<llo_original>
// kernel: tpu_custom_call.1
$region0: #{tpu_custom_call.1}
  #allocation0 [shape = 'u32[]', space=smem, size = 0x4, offset = 0x4, fixed_abs, tag = 'smem constant byte address 0x4 - core index']
  #allocation1 [shape = 'u32[72,128]{1,0:T(1,128)}', space=vmem, size = 0x9000, scoped, tag = 'internal scratch']
  #allocation2 [shape = 'f32[2,8,128]{2,1,0:T(8,128)}', space=vmem, size = 0x2000, scoped, tag = 'scratch operand']
  #allocation3 [shape = 's32[1]{0}', space=sflag, size = 0x4, scoped, tag = 'scoped memory for tpu_custom_call.1']
  #allocation4 [shape = 'u8[512]{0}', space=smem, size = 0x200, scoped, tag = 'prefetched SMEM operand 0']
  %s0 = inlined_call_operand.hbm [shape: s32[2], index: 0, kind: input, shape index: {}]
  %s1 = inlined_call_operand.vmem [shape: f32[2,8,128], index: 1, kind: input, shape index: {}]
  %s2 = inlined_call_operand.vmem [shape: f32[2,8,1], index: 2, kind: input, shape index: {}]
  %s3 = inlined_call_operand.vmem [shape: f32[2,8,1], index: 3, kind: input, shape index: {}]
  %s4 = inlined_call_operand.vmem [shape: bf16[1,8,8], index: 4, kind: input, shape index: {}]
  %s5 = inlined_call_operand.vmem [shape: bf16[8,4], index: 5, kind: input, shape index: {}]
  %s6 = inlined_call_operand.vmem [shape: bf16[4,8], index: 6, kind: input, shape index: {}]
  %s7 = inlined_call_operand.hbm [shape: bf16[128,128], index: 7, kind: input, shape index: {}]
  %s8 = inlined_call_operand.hbm [shape: bf16[128,128], index: 8, kind: input, shape index: {}]
  %s9 = inlined_call_operand.hbm [shape: bf16[128,128], index: 9, kind: input, shape index: {}]
  %s10 = inlined_call_operand.hbm [shape: bf16[128,128], index: 10, kind: input, shape index: {}]
  %s11 = inlined_call_operand.hbm [shape: bf16[128,128], index: 11, kind: input, shape index: {}]
  %s12 = inlined_call_operand.hbm [shape: bf16[128,128], index: 12, kind: input, shape index: {}]
  %s13 = inlined_call_operand.vmem [shape: f32[12,128], index: 13, kind: input, shape index: {}]
  %s14 = inlined_call_operand.vmem [shape: f32[1,128], index: 14, kind: input, shape index: {}]
  %s15 = inlined_call_operand.hbm [shape: f32[2,8,128], index: 15, kind: output, shape index: {}]
  %s16 = sld [smem:[#allocation0]]
  $region121: #{tpu_custom_call.1} parent=0
    _
  %s18 = ssub.s32 1, %s16
  %s19 = scalar_select 0, %s18, %s16
  %s21 = sshll.u32 %s0, 4
  %s22 = int_to_ptr.hbm [resolvable:$true] %s21
  %24 = dma.hbm_to_smem %s22, 16, [#allocation4], [#allocation3]
  %26 = dma.done [#allocation3], 16
  %27 = sfence
  $region1: #{tpu_custom_call.1} parent=0
    #allocation5 [shape = 'u8[32768]{0}', space=vmem, size = 0x8000, scoped, tag = 'input window, operand 7, single buffered']
    #allocation6 [shape = 's32[2]{0}', space=sflag, size = 0x8, scoped, tag = 'scoped memory for tpu_custom_call.1']
    #allocation7 [shape = 's32[2]{0}', space=sflag, size = 0x8, scoped, tag = 'scoped memory for tpu_custom_call.1']
    #allocation8 [shape = 'u8[32768]{0}', space=vmem, size = 0x8000, scoped, tag = 'input window, operand 8, single buffered']
    #allocation9 [shape = 's32[1]{0}', space=sflag, size = 0x4, scoped, tag = 'scoped memory for tpu_custom_call.1']
    #allocation10 [shape = 'u8[32768]{0}', space=vmem, size = 0x8000, scoped, tag = 'input window, operand 9, single buffered']
    #allocation11 [shape = 'u8[32768]{0}', space=vmem, size = 0x8000, scoped, tag = 'input window, operand 10, single buffered']
    #allocation12 [shape = 's32[1]{0}', space=sflag, size = 0x4, scoped, tag = 'scoped memory for tpu_custom_call.1']
    #allocation13 [shape = 'u8[32768]{0}', space=vmem, size = 0x8000, scoped, tag = 'input window, operand 11, single buffered']
    #allocation14 [shape = 'u8[32768]{0}', space=vmem, size = 0x8000, scoped, tag = 'input window, operand 12, single buffered']
    #allocation15 [shape = 's32[1]{0}', space=sflag, size = 0x4, scoped, tag = 'scoped memory for tpu_custom_call.1']
    #allocation16 [shape = 'u8[8192]{0}', space=vmem, size = 0x2000, scoped, tag = 'output window, operand 0, single buffered']
    %28 = vsyncpa [#allocation6], 0
    %29 = vsyncpa [#allocation9], 0
    %30 = vsyncpa [#allocation12], 0
    %31 = vsyncpa [#allocation15], 0
    %32 = vsyncpa [#allocation7], 0
    loop: start=0, step=1, limit=4
    $region2: #{tpu_custom_call.1} parent=1 // loop_pre_header
      _
    $region3: #{tpu_custom_call.1} parent=1 // loop_header
      %s34 = sphi 0, %s38
      %p35 = scmp.ge.s32.totalorder %s34, 4
      %s41 = sphi 0, %s53
      %s42 = sphi 0, %s49
      %s43 = sphi 0, %s41
      %s44 = sphi 0, %s42
      %s45 = sphi 0, %s43
      %s46 = sphi 0, %s44
      %s56 = sphi 0, %s58
      %s59 = sphi 0, %s56
      %s60 = sphi 0, %s59
      %s76 = sphi 0, %s60
      %s82 = sphi 0, %s84
      %s85 = sphi 0, %s82
      %s86 = sphi 0, %s85
      %s102 = sphi 0, %s86
      %s108 = sphi 0, %s110
      %s111 = sphi 0, %s108
      %s112 = sphi 0, %s111
      %s128 = sphi 0, %s112
      %s132 = sphi 0, %s132
      %s134 = sphi 0, %s132
      %s135 = sphi 0, %s134
      %s149 = sphi 0, %s135
      %s153 = sphi 0, %s153
      %s155 = sphi 0, %s153
      %s156 = sphi 0, %s155
      %s170 = sphi 0, %s156
      %s174 = sphi 0, %s174
      %s176 = sphi 0, %s174
      %s177 = sphi 0, %s176
      %s191 = sphi 0, %s177
      %s195 = sphi 0, %s195
      %s197 = sphi 0, %s195
      %s198 = sphi 0, %s197
      %s212 = sphi 0, %s198
      %s216 = sphi 0, %s216
      %s218 = sphi 0, %s216
      %s219 = sphi 0, %s218
      %s233 = sphi 0, %s219
      %s237 = sphi 0, %s237
      %s239 = sphi 0, %s237
      %s240 = sphi 0, %s239
      %s254 = sphi 0, %s240
      %s258 = sphi 0, %s258
      %s260 = sphi 0, %s258
      %s261 = sphi 0, %s260
      %s275 = sphi 0, %s261
      %s279 = sphi 0, %s279
      %s281 = sphi 0, %s279
      %s282 = sphi 0, %s281
      %s296 = sphi 0, %s282
      %s300 = sphi 0, %s300
      %s302 = sphi 0, %s300
      %s303 = sphi 0, %s302
      %s317 = sphi 0, %s303
      %s321 = sphi 0, %s321
      %s323 = sphi 0, %s321
      %s324 = sphi 0, %s323
      %s338 = sphi 0, %s324
      %s342 = sphi 0, %s342
      %s344 = sphi 0, %s342
      %s345 = sphi 0, %s344
      %s359 = sphi 0, %s345
      %s365 = sphi 0, %s367
      %s368 = sphi 0, %s365
      %s369 = sphi 0, %s368
      %s385 = sphi 0, %s369
    $region4: #{tpu_custom_call.1} parent=1 // loop_header_branch
      %37 = sbr.rel (%p35) target = $region8
    $region5: #{tpu_custom_call.1} parent=1 // loop_body
      %s39 = ssub.s32 %s34, 1
      %s40 = ssub.s32 %s34, 2
      %s47 = sadd.s32 1, %s42
      %p48 = scmp.ge.s32.totalorder %s47, 2
      %s49 = scalar_select %p48, 0, %s47
      %s50 = sadd.s32 1, %s41
      %s51 = scalar_select %p48, %s50, %s41
      %p52 = scmp.ge.s32.totalorder %s51, 1
      %s53 = scalar_select %p52, 0, %s51
      %s54 = ssub.s32 %s41, %s53
      %p55 = scmp.eq.s32.totalorder %s54, 0
      %s57 = sadd.s32 %s56, 1
      %s58 = scalar_select %p55, %s56, %s57
      %p61 = pneg %p55
      %p62 = scmp.eq.s32.totalorder %s34, 1
      %p63 = por %p61, %p62
      %p64 = scmp.ne.s32.totalorder %s56, %s59
      %p65 = scmp.eq.s32.totalorder %s34, 0
      %p66 = por %p64, %p65
      %p67 = scmp.ne.s32.totalorder %s56, %s59
      %p68 = scmp.eq.s32.totalorder %s39, 1
      %p69 = por %p67, %p68
      %p70 = scmp.ne.s32.totalorder %s59, %s60
      %p71 = scmp.eq.s32.totalorder %s39, 0
      %p72 = por %p70, %p71
      %p73 = scmp.ne.s32.totalorder %s59, %s60
      %p74 = scmp.eq.s32.totalorder %s40, 1
      %p75 = por %p73, %p74
      %p77 = scmp.ne.s32.totalorder %s60, %s76
      %p78 = scmp.eq.s32.totalorder %s40, 0
      %p79 = por %p77, %p78
      %s80 = ssub.s32 %s41, %s53
      %p81 = scmp.eq.s32.totalorder %s80, 0
      %s83 = sadd.s32 %s82, 1
      %s84 = scalar_select %p81, %s82, %s83
      %p87 = pneg %p81
      %p88 = scmp.eq.s32.totalorder %s34, 1
      %p89 = por %p87, %p88
      %p90 = scmp.ne.s32.totalorder %s82, %s85
      %p91 = scmp.eq.s32.totalorder %s34, 0
      %p92 = por %p90, %p91
      %p93 = scmp.ne.s32.totalorder %s82, %s85
      %p94 = scmp.eq.s32.totalorder %s39, 1
      %p95 = por %p93, %p94
      %p96 = scmp.ne.s32.totalorder %s85, %s86
      %p97 = scmp.eq.s32.totalorder %s39, 0
      %p98 = por %p96, %p97
      %p99 = scmp.ne.s32.totalorder %s85, %s86
      %p100 = scmp.eq.s32.totalorder %s40, 1
      %p101 = por %p99, %p100
      %p103 = scmp.ne.s32.totalorder %s86, %s102
      %p104 = scmp.eq.s32.totalorder %s40, 0
      %p105 = por %p103, %p104
      %s106 = ssub.s32 %s41, %s53
      %p107 = scmp.eq.s32.totalorder %s106, 0
      %s109 = sadd.s32 %s108, 1
      %s110 = scalar_select %p107, %s108, %s109
      %p113 = pneg %p107
      %p114 = scmp.eq.s32.totalorder %s34, 1
      %p115 = por %p113, %p114
      %p116 = scmp.ne.s32.totalorder %s108, %s111
      %p117 = scmp.eq.s32.totalorder %s34, 0
      %p118 = por %p116, %p117
      %p119 = scmp.ne.s32.totalorder %s108, %s111
      %p120 = scmp.eq.s32.totalorder %s39, 1
      %p121 = por %p119, %p120
      %p122 = scmp.ne.s32.totalorder %s111, %s112
      %p123 = scmp.eq.s32.totalorder %s39, 0
      %p124 = por %p122, %p123
      %p125 = scmp.ne.s32.totalorder %s111, %s112
      %p126 = scmp.eq.s32.totalorder %s40, 1
      %p127 = por %p125, %p126
      %p129 = scmp.ne.s32.totalorder %s112, %s128
      %p130 = scmp.eq.s32.totalorder %s40, 0
      %p131 = por %p129, %p130
      %s133 = sadd.s32 %s132, 1
      %p136 = scmp.eq.s32.totalorder %s34, 1
      %p137 = scmp.ne.s32.totalorder %s132, %s134
      %p138 = scmp.eq.s32.totalorder %s34, 0
      %p139 = por %p137, %p138
      %p140 = scmp.ne.s32.totalorder %s132, %s134
      %p141 = scmp.eq.s32.totalorder %s39, 1
      %p142 = por %p140, %p141
      %p143 = scmp.ne.s32.totalorder %s134, %s135
      %p144 = scmp.eq.s32.totalorder %s39, 0
      %p145 = por %p143, %p144
      %p146 = scmp.ne.s32.totalorder %s134, %s135
      %p147 = scmp.eq.s32.totalorder %s40, 1
      %p148 = por %p146, %p147
      %p150 = scmp.ne.s32.totalorder %s135, %s149
      %p151 = scmp.eq.s32.totalorder %s40, 0
      %p152 = por %p150, %p151
      %s154 = sadd.s32 %s153, 1
      %p157 = scmp.eq.s32.totalorder %s34, 1
      %p158 = scmp.ne.s32.totalorder %s153, %s155
      %p159 = scmp.eq.s32.totalorder %s34, 0
      %p160 = por %p158, %p159
      %p161 = scmp.ne.s32.totalorder %s153, %s155
      %p162 = scmp.eq.s32.totalorder %s39, 1
      %p163 = por %p161, %p162
      %p164 = scmp.ne.s32.totalorder %s155, %s156
      %p165 = scmp.eq.s32.totalorder %s39, 0
      %p166 = por %p164, %p165
      %p167 = scmp.ne.s32.totalorder %s155, %s156
      %p168 = scmp.eq.s32.totalorder %s40, 1
      %p169 = por %p167, %p168
      %p171 = scmp.ne.s32.totalorder %s156, %s170
      %p172 = scmp.eq.s32.totalorder %s40, 0
      %p173 = por %p171, %p172
      %s175 = sadd.s32 %s174, 1
      %p178 = scmp.eq.s32.totalorder %s34, 1
      %p179 = scmp.ne.s32.totalorder %s174, %s176
      %p180 = scmp.eq.s32.totalorder %s34, 0
      %p181 = por %p179, %p180
      %p182 = scmp.ne.s32.totalorder %s174, %s176
      %p183 = scmp.eq.s32.totalorder %s39, 1
      %p184 = por %p182, %p183
      %p185 = scmp.ne.s32.totalorder %s176, %s177
      %p186 = scmp.eq.s32.totalorder %s39, 0
      %p187 = por %p185, %p186
      %p188 = scmp.ne.s32.totalorder %s176, %s177
      %p189 = scmp.eq.s32.totalorder %s40, 1
      %p190 = por %p188, %p189
      %p192 = scmp.ne.s32.totalorder %s177, %s191
      %p193 = scmp.eq.s32.totalorder %s40, 0
      %p194 = por %p192, %p193
      %s196 = sadd.s32 %s195, 1
      %p199 = scmp.eq.s32.totalorder %s34, 1
      %p200 = scmp.ne.s32.totalorder %s195, %s197
      %p201 = scmp.eq.s32.totalorder %s34, 0
      %p202 = por %p200, %p201
      %p203 = scmp.ne.s32.totalorder %s195, %s197
      %p204 = scmp.eq.s32.totalorder %s39, 1
      %p205 = por %p203, %p204
      %p206 = scmp.ne.s32.totalorder %s197, %s198
      %p207 = scmp.eq.s32.totalorder %s39, 0
      %p208 = por %p206, %p207
      %p209 = scmp.ne.s32.totalorder %s197, %s198
      %p210 = scmp.eq.s32.totalorder %s40, 1
      %p211 = por %p209, %p210
      %p213 = scmp.ne.s32.totalorder %s198, %s212
      %p214 = scmp.eq.s32.totalorder %s40, 0
      %p215 = por %p213, %p214
      %s217 = sadd.s32 %s216, 1
      %p220 = scmp.eq.s32.totalorder %s34, 1
      %p221 = scmp.ne.s32.totalorder %s216, %s218
      %p222 = scmp.eq.s32.totalorder %s34, 0
      %p223 = por %p221, %p222
      %p224 = scmp.ne.s32.totalorder %s216, %s218
      %p225 = scmp.eq.s32.totalorder %s39, 1
      %p226 = por %p224, %p225
      %p227 = scmp.ne.s32.totalorder %s218, %s219
      %p228 = scmp.eq.s32.totalorder %s39, 0
      %p229 = por %p227, %p228
      %p230 = scmp.ne.s32.totalorder %s218, %s219
      %p231 = scmp.eq.s32.totalorder %s40, 1
      %p232 = por %p230, %p231
      %p234 = scmp.ne.s32.totalorder %s219, %s233
      %p235 = scmp.eq.s32.totalorder %s40, 0
      %p236 = por %p234, %p235
      %s238 = sadd.s32 %s237, 1
      %p241 = scmp.eq.s32.totalorder %s34, 1
      %p242 = scmp.ne.s32.totalorder %s237, %s239
      %p243 = scmp.eq.s32.totalorder %s34, 0
      %p244 = por %p242, %p243
      %p245 = scmp.ne.s32.totalorder %s237, %s239
      %p246 = scmp.eq.s32.totalorder %s39, 1
      %p247 = por %p245, %p246
      %p248 = scmp.ne.s32.totalorder %s239, %s240
      %p249 = scmp.eq.s32.totalorder %s39, 0
      %p250 = por %p248, %p249
      %p251 = scmp.ne.s32.totalorder %s239, %s240
      %p252 = scmp.eq.s32.totalorder %s40, 1
      %p253 = por %p251, %p252
      %p255 = scmp.ne.s32.totalorder %s240, %s254
      %p256 = scmp.eq.s32.totalorder %s40, 0
      %p257 = por %p255, %p256
      %s259 = sadd.s32 %s258, 1
      %p262 = scmp.eq.s32.totalorder %s34, 1
      %p263 = scmp.ne.s32.totalorder %s258, %s260
      %p264 = scmp.eq.s32.totalorder %s34, 0
      %p265 = por %p263, %p264
      %p266 = scmp.ne.s32.totalorder %s258, %s260
      %p267 = scmp.eq.s32.totalorder %s39, 1
      %p268 = por %p266, %p267
      %p269 = scmp.ne.s32.totalorder %s260, %s261
      %p270 = scmp.eq.s32.totalorder %s39, 0
      %p271 = por %p269, %p270
      %p272 = scmp.ne.s32.totalorder %s260, %s261
      %p273 = scmp.eq.s32.totalorder %s40, 1
      %p274 = por %p272, %p273
      %p276 = scmp.ne.s32.totalorder %s261, %s275
      %p277 = scmp.eq.s32.totalorder %s40, 0
      %p278 = por %p276, %p277
      %s280 = sadd.s32 %s279, 1
      %p283 = scmp.eq.s32.totalorder %s34, 1
      %p284 = scmp.ne.s32.totalorder %s279, %s281
      %p285 = scmp.eq.s32.totalorder %s34, 0
      %p286 = por %p284, %p285
      %p287 = scmp.ne.s32.totalorder %s279, %s281
      %p288 = scmp.eq.s32.totalorder %s39, 1
      %p289 = por %p287, %p288
      %p290 = scmp.ne.s32.totalorder %s281, %s282
      %p291 = scmp.eq.s32.totalorder %s39, 0
      %p292 = por %p290, %p291
      %p293 = scmp.ne.s32.totalorder %s281, %s282
      %p294 = scmp.eq.s32.totalorder %s40, 1
      %p295 = por %p293, %p294
      %p297 = scmp.ne.s32.totalorder %s282, %s296
      %p298 = scmp.eq.s32.totalorder %s40, 0
      %p299 = por %p297, %p298
      %s301 = sadd.s32 %s300, 1
      %p304 = scmp.eq.s32.totalorder %s34, 1
      %p305 = scmp.ne.s32.totalorder %s300, %s302
      %p306 = scmp.eq.s32.totalorder %s34, 0
      %p307 = por %p305, %p306
      %p308 = scmp.ne.s32.totalorder %s300, %s302
      %p309 = scmp.eq.s32.totalorder %s39, 1
      %p310 = por %p308, %p309
      %p311 = scmp.ne.s32.totalorder %s302, %s303
      %p312 = scmp.eq.s32.totalorder %s39, 0
      %p313 = por %p311, %p312
      %p314 = scmp.ne.s32.totalorder %s302, %s303
      %p315 = scmp.eq.s32.totalorder %s40, 1
      %p316 = por %p314, %p315
      %p318 = scmp.ne.s32.totalorder %s303, %s317
      %p319 = scmp.eq.s32.totalorder %s40, 0
      %p320 = por %p318, %p319
      %s322 = sadd.s32 %s321, 1
      %p325 = scmp.eq.s32.totalorder %s34, 1
      %p326 = scmp.ne.s32.totalorder %s321, %s323
      %p327 = scmp.eq.s32.totalorder %s34, 0
      %p328 = por %p326, %p327
      %p329 = scmp.ne.s32.totalorder %s321, %s323
      %p330 = scmp.eq.s32.totalorder %s39, 1
      %p331 = por %p329, %p330
      %p332 = scmp.ne.s32.totalorder %s323, %s324
      %p333 = scmp.eq.s32.totalorder %s39, 0
      %p334 = por %p332, %p333
      %p335 = scmp.ne.s32.totalorder %s323, %s324
      %p336 = scmp.eq.s32.totalorder %s40, 1
      %p337 = por %p335, %p336
      %p339 = scmp.ne.s32.totalorder %s324, %s338
      %p340 = scmp.eq.s32.totalorder %s40, 0
      %p341 = por %p339, %p340
      %s343 = sadd.s32 %s342, 1
      %p346 = scmp.eq.s32.totalorder %s34, 1
      %p347 = scmp.ne.s32.totalorder %s342, %s344
      %p348 = scmp.eq.s32.totalorder %s34, 0
      %p349 = por %p347, %p348
      %p350 = scmp.ne.s32.totalorder %s342, %s344
      %p351 = scmp.eq.s32.totalorder %s39, 1
      %p352 = por %p350, %p351
      %p353 = scmp.ne.s32.totalorder %s344, %s345
      %p354 = scmp.eq.s32.totalorder %s39, 0
      %p355 = por %p353, %p354
      %p356 = scmp.ne.s32.totalorder %s344, %s345
      %p357 = scmp.eq.s32.totalorder %s40, 1
      %p358 = por %p356, %p357
      %p360 = scmp.ne.s32.totalorder %s345, %s359
      %p361 = scmp.eq.s32.totalorder %s40, 0
      %p362 = por %p360, %p361
      %s363 = ssub.s32 %s41, %s53
      %p364 = scmp.eq.s32.totalorder %s363, 0
      %s366 = sadd.s32 %s365, 1
      %s367 = scalar_select %p364, %s365, %s366
      %p370 = pneg %p364
      %p371 = scmp.eq.s32.totalorder %s34, 1
      %p372 = por %p370, %p371
      %p373 = scmp.ne.s32.totalorder %s365, %s368
      %p374 = scmp.eq.s32.totalorder %s34, 0
      %p375 = por %p373, %p374
      %p376 = scmp.ne.s32.totalorder %s365, %s368
      %p377 = scmp.eq.s32.totalorder %s39, 1
      %p378 = por %p376, %p377
      %p379 = scmp.ne.s32.totalorder %s368, %s369
      %p380 = scmp.eq.s32.totalorder %s39, 0
      %p381 = por %p379, %p380
      %p382 = scmp.ne.s32.totalorder %s368, %s369
      %p383 = scmp.eq.s32.totalorder %s40, 1
      %p384 = por %p382, %p383
      %p386 = scmp.ne.s32.totalorder %s369, %s385
      %p387 = scmp.eq.s32.totalorder %s40, 0
      %p388 = por %p386, %p387
      %p389 = scmp.le.s32.totalorder 1, %s34
      %p390 = scmp.lt.s32.totalorder %s34, 3
      %p391 = pnand %p389, %p390
      %p392 = pneg %p391
      // Predicated region
      $region9: #{tpu_custom_call.1} parent=5 // pred_check
        _
      $region10: #{tpu_custom_call.1} parent=5 // pred_check_branch
        %394 = sbr.rel (%p391) target = $region12
      $region11: #{tpu_custom_call.1} parent=5 // pred_region
        %s395 = ssub.s32 %s34, 1
        // Predicated region
        $region13: #{tpu_custom_call.1} parent=11 // pred_check
          %p396 = pneg %p72
        $region14: #{tpu_custom_call.1} parent=11 // pred_check_branch
          %398 = sbr.rel (%p396) target = $region16
        $region15: #{tpu_custom_call.1} parent=11 // pred_region
          %s399 = smul.u32 2, %s43
          %p400 = scmp.lt.s32.totalorder %s399, 1
          %s401 = scalar_select %p400, %s399, 1
          %s402 = smul.addr %s401, 8
          %s403 = scalar_lea.vmem %s1, %s402
          %s404 = smul.u32 2, %s43
        $region16: #{tpu_custom_call.1} parent=11 // pred_fallthru
          _
        // Predicated region
        $region17: #{tpu_custom_call.1} parent=11 // pred_check
          %p405 = pneg %p98
        $region18: #{tpu_custom_call.1} parent=11 // pred_check_branch
          %407 = sbr.rel (%p405) target = $region20
        $region19: #{tpu_custom_call.1} parent=11 // pred_region
          %s408 = smul.u32 2, %s43
          %p409 = scmp.lt.s32.totalorder %s408, 1
          %s410 = scalar_select %p409, %s408, 1
          %s411 = smul.addr %s410, 8
          %s412 = scalar_lea.vmem %s2, %s411
          %s413 = smul.u32 2, %s43
        $region20: #{tpu_custom_call.1} parent=11 // pred_fallthru
          _
        // Predicated region
        $region21: #{tpu_custom_call.1} parent=11 // pred_check
          %p414 = pneg %p124
        $region22: #{tpu_custom_call.1} parent=11 // pred_check_branch
          %416 = sbr.rel (%p414) target = $region24
        $region23: #{tpu_custom_call.1} parent=11 // pred_region
          %s417 = smul.u32 2, %s43
          %p418 = scmp.lt.s32.totalorder %s417, 1
          %s419 = scalar_select %p418, %s417, 1
          %s420 = smul.addr %s419, 8
          %s421 = scalar_lea.vmem %s3, %s420
          %s422 = smul.u32 2, %s43
        $region24: #{tpu_custom_call.1} parent=11 // pred_fallthru
          _
        // Predicated region
        $region25: #{tpu_custom_call.1} parent=11 // pred_check
          %p423 = pneg %p145
        $region26: #{tpu_custom_call.1} parent=11 // pred_check_branch
          %425 = sbr.rel (%p423) target = $region28
        $region27: #{tpu_custom_call.1} parent=11 // pred_region
          _
        $region28: #{tpu_custom_call.1} parent=11 // pred_fallthru
          _
        // Predicated region
        $region29: #{tpu_custom_call.1} parent=11 // pred_check
          %p426 = pneg %p166
        $region30: #{tpu_custom_call.1} parent=11 // pred_check_branch
          %428 = sbr.rel (%p426) target = $region32
        $region31: #{tpu_custom_call.1} parent=11 // pred_region
          _
        $region32: #{tpu_custom_call.1} parent=11 // pred_fallthru
          _
        // Predicated region
        $region33: #{tpu_custom_call.1} parent=11 // pred_check
          %p429 = pneg %p187
        $region34: #{tpu_custom_call.1} parent=11 // pred_check_branch
          %431 = sbr.rel (%p429) target = $region36
        $region35: #{tpu_custom_call.1} parent=11 // pred_region
          _
        $region36: #{tpu_custom_call.1} parent=11 // pred_fallthru
          _
        // Predicated region
        $region37: #{tpu_custom_call.1} parent=11 // pred_check
          %p432 = pneg %p208
        $region38: #{tpu_custom_call.1} parent=11 // pred_check_branch
          %434 = sbr.rel (%p432) target = $region40
        $region39: #{tpu_custom_call.1} parent=11 // pred_region
          %436 = vsyncadd [#allocation6], 0
          %s437 = sshll.u32 %s7, 4
          %s438 = int_to_ptr.hbm [resolvable:$true] %s437
          %s439 = sshll.u32 [#allocation5], 4
          %s440 = int_to_ptr.vmem [resolvable:$true] %s439
          %445 = dma.hbm_to_vmem [thread:$0]  %s438, 1024, %s440, [#allocation6], 64, 64, 4
        $region40: #{tpu_custom_call.1} parent=11 // pred_fallthru
          _
        // Predicated region
        $region41: #{tpu_custom_call.1} parent=11 // pred_check
          %p446 = pneg %p229
        $region42: #{tpu_custom_call.1} parent=11 // pred_check_branch
          %448 = sbr.rel (%p446) target = $region44
        $region43: #{tpu_custom_call.1} parent=11 // pred_region
          %450 = vsyncadd [#allocation9], 0
          %s451 = sshll.u32 %s8, 4
          %s452 = int_to_ptr.hbm [resolvable:$true] %s451
          %s453 = sshll.u32 [#allocation8], 4
          %s454 = int_to_ptr.vmem [resolvable:$true] %s453
          %459 = dma.hbm_to_vmem [thread:$0]  %s452, 1024, %s454, [#allocation9], 64, 64, 4
        $region44: #{tpu_custom_call.1} parent=11 // pred_fallthru
          _
        // Predicated region
        $region45: #{tpu_custom_call.1} parent=11 // pred_check
          %p460 = pneg %p250
        $region46: #{tpu_custom_call.1} parent=11 // pred_check_branch
          %462 = sbr.rel (%p460) target = $region48
        $region47: #{tpu_custom_call.1} parent=11 // pred_region
          %464 = vsyncadd [#allocation9], 0
          %s465 = sshll.u32 %s9, 4
          %s466 = int_to_ptr.hbm [resolvable:$true] %s465
          %s467 = sshll.u32 [#allocation10], 4
          %s468 = int_to_ptr.vmem [resolvable:$true] %s467
          %473 = dma.hbm_to_vmem [thread:$0]  %s466, 1024, %s468, [#allocation9], 64, 64, 4
        $region48: #{tpu_custom_call.1} parent=11 // pred_fallthru
          _
        // Predicated region
        $region49: #{tpu_custom_call.1} parent=11 // pred_check
          %p474 = pneg %p271
        $region50: #{tpu_custom_call.1} parent=11 // pred_check_branch
          %476 = sbr.rel (%p474) target = $region52
        $region51: #{tpu_custom_call.1} parent=11 // pred_region
          %478 = vsyncadd [#allocation12], 0
          %s479 = sshll.u32 %s10, 4
          %s480 = int_to_ptr.hbm [resolvable:$true] %s479
          %s481 = sshll.u32 [#allocation11], 4
          %s482 = int_to_ptr.vmem [resolvable:$true] %s481
          %487 = dma.hbm_to_vmem [thread:$0]  %s480, 1024, %s482, [#allocation12], 64, 64, 4
        $region52: #{tpu_custom_call.1} parent=11 // pred_fallthru
          _
        // Predicated region
        $region53: #{tpu_custom_call.1} parent=11 // pred_check
          %p488 = pneg %p292
        $region54: #{tpu_custom_call.1} parent=11 // pred_check_branch
          %490 = sbr.rel (%p488) target = $region56
        $region55: #{tpu_custom_call.1} parent=11 // pred_region
          %492 = vsyncadd [#allocation12], 0
          %s493 = sshll.u32 %s11, 4
          %s494 = int_to_ptr.hbm [resolvable:$true] %s493
          %s495 = sshll.u32 [#allocation13], 4
          %s496 = int_to_ptr.vmem [resolvable:$true] %s495
          %501 = dma.hbm_to_vmem [thread:$0]  %s494, 1024, %s496, [#allocation12], 64, 64, 4
        $region56: #{tpu_custom_call.1} parent=11 // pred_fallthru
          _
        // Predicated region
        $region57: #{tpu_custom_call.1} parent=11 // pred_check
          %p502 = pneg %p313
        $region58: #{tpu_custom_call.1} parent=11 // pred_check_branch
          %504 = sbr.rel (%p502) target = $region60
        $region59: #{tpu_custom_call.1} parent=11 // pred_region
          %506 = vsyncadd [#allocation15], 0
          %s507 = sshll.u32 %s12, 4
          %s508 = int_to_ptr.hbm [resolvable:$true] %s507
          %s509 = sshll.u32 [#allocation14], 4
          %s510 = int_to_ptr.vmem [resolvable:$true] %s509
          %515 = dma.hbm_to_vmem [thread:$0]  %s508, 1024, %s510, [#allocation15], 64, 64, 4
        $region60: #{tpu_custom_call.1} parent=11 // pred_fallthru
          _
        // Predicated region
        $region61: #{tpu_custom_call.1} parent=11 // pred_check
          %p516 = pneg %p334
        $region62: #{tpu_custom_call.1} parent=11 // pred_check_branch
          %518 = sbr.rel (%p516) target = $region64
        $region63: #{tpu_custom_call.1} parent=11 // pred_region
          _
        $region64: #{tpu_custom_call.1} parent=11 // pred_fallthru
          _
        // Predicated region
        $region65: #{tpu_custom_call.1} parent=11 // pred_check
          %p519 = pneg %p355
        $region66: #{tpu_custom_call.1} parent=11 // pred_check_branch
          %521 = sbr.rel (%p519) target = $region68
        $region67: #{tpu_custom_call.1} parent=11 // pred_region
          _
        $region68: #{tpu_custom_call.1} parent=11 // pred_fallthru
          _
      $region12: #{tpu_custom_call.1} parent=5 // pred_fallthru
        _
      %p522 = scmp.lt.s32.totalorder %s34, 2
      // Predicated region
      $region69: #{tpu_custom_call.1} parent=5 // pred_check
        %p523 = pneg %p522
      $region70: #{tpu_custom_call.1} parent=5 // pred_check_branch
        %525 = sbr.rel (%p523) target = $region72
      $region71: #{tpu_custom_call.1} parent=5 // pred_region
        _
      $region72: #{tpu_custom_call.1} parent=5 // pred_fallthru
        _
      %p526 = scmp.le.s32.totalorder 1, %s34
      %p527 = scmp.lt.s32.totalorder %s34, 3
      %p528 = pnand %p526, %p527
      %p529 = pneg %p528
      // Predicated region
      $region73: #{tpu_custom_call.1} parent=5 // pred_check
        _
      $region74: #{tpu_custom_call.1} parent=5 // pred_check_branch
        %531 = sbr.rel (%p528) target = $region76
      $region75: #{tpu_custom_call.1} parent=5 // pred_region
        %s532 = ssub.s32 %s34, 1
        // Predicated region
        $region77: #{tpu_custom_call.1} parent=75 // pred_check
          %p533 = pneg %p208
        $region78: #{tpu_custom_call.1} parent=75 // pred_check_branch
          %535 = sbr.rel (%p533) target = $region80
        $region79: #{tpu_custom_call.1} parent=75 // pred_region
          %537 = dma.done [#allocation6], 1024
        $region80: #{tpu_custom_call.1} parent=75 // pred_fallthru
          _
        // Predicated region
        $region81: #{tpu_custom_call.1} parent=75 // pred_check
          %p538 = pneg %p229
        $region82: #{tpu_custom_call.1} parent=75 // pred_check_branch
          %540 = sbr.rel (%p538) target = $region84
        $region83: #{tpu_custom_call.1} parent=75 // pred_region
          %542 = dma.done [#allocation9], 1024
        $region84: #{tpu_custom_call.1} parent=75 // pred_fallthru
          _
        // Predicated region
        $region85: #{tpu_custom_call.1} parent=75 // pred_check
          %p543 = pneg %p250
        $region86: #{tpu_custom_call.1} parent=75 // pred_check_branch
          %545 = sbr.rel (%p543) target = $region88
        $region87: #{tpu_custom_call.1} parent=75 // pred_region
          %547 = dma.done [#allocation9], 1024
        $region88: #{tpu_custom_call.1} parent=75 // pred_fallthru
          _
        // Predicated region
        $region89: #{tpu_custom_call.1} parent=75 // pred_check
          %p548 = pneg %p271
        $region90: #{tpu_custom_call.1} parent=75 // pred_check_branch
          %550 = sbr.rel (%p548) target = $region92
        $region91: #{tpu_custom_call.1} parent=75 // pred_region
          %552 = dma.done [#allocation12], 1024
        $region92: #{tpu_custom_call.1} parent=75 // pred_fallthru
          _
        // Predicated region
        $region93: #{tpu_custom_call.1} parent=75 // pred_check
          %p553 = pneg %p292
        $region94: #{tpu_custom_call.1} parent=75 // pred_check_branch
          %555 = sbr.rel (%p553) target = $region96
        $region95: #{tpu_custom_call.1} parent=75 // pred_region
          %557 = dma.done [#allocation12], 1024
        $region96: #{tpu_custom_call.1} parent=75 // pred_fallthru
          _
        // Predicated region
        $region97: #{tpu_custom_call.1} parent=75 // pred_check
          %p558 = pneg %p313
        $region98: #{tpu_custom_call.1} parent=75 // pred_check_branch
          %560 = sbr.rel (%p558) target = $region100
        $region99: #{tpu_custom_call.1} parent=75 // pred_region
          %562 = dma.done [#allocation15], 1024
        $region100: #{tpu_custom_call.1} parent=75 // pred_fallthru
          _
        %s563 = smul.u32 2, %s43
        %p564 = scmp.lt.s32.totalorder %s563, 1
        %s565 = scalar_select %p564, %s563, 1
        %s566 = smul.addr %s565, 8
        %s567 = scalar_lea.vmem %s1, %s566
        %p568 = pneg %p72
        %p569 = pneg %p69
        %s570 = smul.u32 2, %s43
        %p571 = scmp.lt.s32.totalorder %s570, 1
        %s572 = scalar_select %p571, %s570, 1
        %s573 = smul.addr %s572, 8
        %s574 = scalar_lea.vmem %s2, %s573
        %p575 = pneg %p98
        %p576 = pneg %p95
        %s577 = smul.u32 2, %s43
        %p578 = scmp.lt.s32.totalorder %s577, 1
        %s579 = scalar_select %p578, %s577, 1
        %s580 = smul.addr %s579, 8
        %s581 = scalar_lea.vmem %s3, %s580
        %p582 = pneg %p124
        %p583 = pneg %p121
        %p584 = pneg %p145
        %p585 = pneg %p142
        %p586 = pneg %p166
        %p587 = pneg %p163
        %p588 = pneg %p187
        %p589 = pneg %p184
        %p590 = pneg %p208
        %p591 = pneg %p205
        %p592 = pneg %p229
        %p593 = pneg %p226
        %p594 = pneg %p250
        %p595 = pneg %p247
        %p596 = pneg %p271
        %p597 = pneg %p268
        %p598 = pneg %p292
        %p599 = pneg %p289
        %p600 = pneg %p313
        %p601 = pneg %p310
        %p602 = pneg %p334
        %p603 = pneg %p331
        %p604 = pneg %p355
        %p605 = pneg %p352
        %p606 = pneg %p381
        %p607 = pneg %p378
        %s608 = smul.u32 2, %s43
        %p609 = scmp.lt.s32.totalorder %s608, 1
        %s610 = scalar_select %p609, %s608, 1
        %s611 = smul.addr %s610, 8
        %s612 = scalar_lea.vmem %s1, %s611
        %s613 = smul.u32 2, %s43
        %s614 = smul.u32 2, %s43
        %p615 = scmp.lt.s32.totalorder %s614, 1
        %s616 = scalar_select %p615, %s614, 1
        %s617 = smul.addr %s616, 8
        %s618 = scalar_lea.vmem %s2, %s617
        %s619 = smul.u32 2, %s43
        %s620 = smul.u32 2, %s43
        %p621 = scmp.lt.s32.totalorder %s620, 1
        %s622 = scalar_select %p621, %s620, 1
        %s623 = smul.addr %s622, 8
        %s624 = scalar_lea.vmem %s3, %s623
        %s625 = smul.u32 2, %s43
        %s626 = smul.u32 2, %s43
        %p628 = scmp.eq.s32.totalorder %s44, 0
        // Predicated region
        $region101: #{tpu_custom_call.1} parent=75 // pred_check
          %p629 = pneg %p628
        $region102: #{tpu_custom_call.1} parent=75 // pred_check_branch
          %631 = sbr.rel (%p629) target = $region104
        $region103: #{tpu_custom_call.1} parent=75 // pred_region
          %v632 = vld [vmem:[%s612] sm:$0xff]
          %v633 = vld [vmem:[%s612 + $0x8] sm:$0xff]
          %634 = vst [vmem:[#allocation2] sm:$0xff] %v632
          %635 = vst [vmem:[#allocation2 + $0x8] sm:$0xff] %v633
        $region104: #{tpu_custom_call.1} parent=75 // pred_fallthru
          _
        %v636 = vld [vmem:[#allocation2] sm:$0xff]
        %v637 = vld [vmem:[#allocation2 + $0x8] sm:$0xff]
        %v638 = vpack.c.bf16 %v636, %v636
        %v639 = vpack.c.bf16 %v637, %v637
        %v640 = vld [vmem:[%s5] sm:$0xf]
        %v641 = vld [vmem:[%s6] sm:$0x3]
        %vm642 = vcmask 64512
        %v644 = vsel %vm642, %v641, 0
        %vm646 = vcmask 1043456
        %v648 = vsel %vm646, %v638, 0
        %650 = vmatpush.bf16.msra.mxu0 0
        %651 = vmatpush.bf16.msra.mxu0 0
        %652 = vmatpush.bf16.msra.mxu0 0
        %653 = vmatpush.bf16.msra.mxu0 0
        %654 = vmatpush.bf16.msra.mxu0 0
        %655 = vmatpush.bf16.msra.mxu0 0
        %656 = vmatpush.bf16.msra.mxu0 0
        %657 = vmatpush.bf16.msra.mxu0 %v648
        %658 = vmatmul.bf16.gmra.mxu0 %v644
        %v659 = vpop.f32.mrf.mxu0
        %v660 = vadd.f32 0.0, %v659
        %v661 = vpop.f32.mrf.mxu0
        %662 = vdwg.mxu0
        %v664 = vsel %vm646, %v639, 0
        %666 = vmatpush.bf16.msra.mxu0 0
        %667 = vmatpush.bf16.msra.mxu0 0
        %668 = vmatpush.bf16.msra.mxu0 0
        %669 = vmatpush.bf16.msra.mxu0 0
        %670 = vmatpush.bf16.msra.mxu0 0
        %671 = vmatpush.bf16.msra.mxu0 0
        %672 = vmatpush.bf16.msra.mxu0 0
        %673 = vmatpush.bf16.msra.mxu0 %v664
        %674 = vmatmul.bf16.gmra.mxu0 %v644
        %v675 = vpop.f32.mrf.mxu0
        %v676 = vadd.f32 0.0, %v675
        %v677 = vpop.f32.mrf.mxu0
        %678 = vdwg.mxu0
        %v679 = vpack.c.bf16 %v660, %v660
        %v680 = vpack.c.bf16 %v676, %v676
        %vm681 = vcmask 31744
        %v683 = vsel %vm681, %v640, 0
        %vm685 = vcmask 1041408
        %v687 = vsel %vm685, %v679, 0
        %689 = vmatpush.bf16.msra.mxu0 0
        %690 = vmatpush.bf16.msra.mxu0 0
        %691 = vmatpush.bf16.msra.mxu0 0
        %692 = vmatpush.bf16.msra.mxu0 0
        %693 = vmatpush.bf16.msra.mxu0 0
        %694 = vmatpush.bf16.msra.mxu0 0
        %695 = vmatpush.bf16.msra.mxu0 0
        %696 = vmatpush.bf16.msra.mxu0 %v687
        %697 = vmatmul.bf16.gmra.mxu0 %v683
        %v698 = vpop.f32.mrf.mxu0
        %v699 = vadd.f32 0.0, %v698
        %v700 = vpop.f32.mrf.mxu0
        %701 = vdwg.mxu0
        %v703 = vsel %vm685, %v680, 0
        %705 = vmatpush.bf16.msra.mxu0 0
        %706 = vmatpush.bf16.msra.mxu0 0
        %707 = vmatpush.bf16.msra.mxu0 0
        %708 = vmatpush.bf16.msra.mxu0 0
        %709 = vmatpush.bf16.msra.mxu0 0
        %710 = vmatpush.bf16.msra.mxu0 0
        %711 = vmatpush.bf16.msra.mxu0 0
        %712 = vmatpush.bf16.msra.mxu0 %v703
        %713 = vmatmul.bf16.gmra.mxu0 %v683
        %v714 = vpop.f32.mrf.mxu0
        %v715 = vadd.f32 0.0, %v714
        %v716 = vpop.f32.mrf.mxu0
        %717 = vdwg.mxu0
        %v718 = vmul.f32 %v699, 0.25
        %v719 = vmul.f32 %v715, 0.25
        %v720 = vpack.c.bf16 %v719, %v718
        %v721 = vld [vmem:[%s13] sm:$0xff]
        %v722 = vld [vmem:[%s13 + $0x8] sm:$0xf]
        %v723 = vld [vmem:[%s618] sm:$0xff]
        %v724 = vld [vmem:[%s618 + $0x8] sm:$0xff]
        %v725 = vld [vmem:[%s624] sm:$0xff]
        %v726 = vld [vmem:[%s624 + $0x8] sm:$0xff]
        %v727 = vld [vmem:[#allocation5] sm:$0xf]
        %v728 = vld [vmem:[#allocation5 + $0x4] sm:$0xf]
        %v729 = vld [vmem:[#allocation5 + $0x8] sm:$0xf]
        %v730 = vld [vmem:[#allocation5 + $0xc] sm:$0xf]
        %v731 = vld [vmem:[#allocation5 + $0x10] sm:$0xf]
        %v732 = vld [vmem:[#allocation5 + $0x14] sm:$0xf]
        %v733 = vld [vmem:[#allocation5 + $0x18] sm:$0xf]
        %v734 = vld [vmem:[#allocation5 + $0x1c] sm:$0xf]
        %v735 = vld [vmem:[#allocation5 + $0x20] sm:$0xf]
        %v736 = vld [vmem:[#allocation5 + $0x24] sm:$0xf]
        %v737 = vld [vmem:[#allocation5 + $0x28] sm:$0xf]
        %v738 = vld [vmem:[#allocation5 + $0x2c] sm:$0xf]
        %v739 = vld [vmem:[#allocation5 + $0x30] sm:$0xf]
        %v740 = vld [vmem:[#allocation5 + $0x34] sm:$0xf]
        %v741 = vld [vmem:[#allocation5 + $0x38] sm:$0xf]
        %v742 = vld [vmem:[#allocation5 + $0x3c] sm:$0xf]
        %v759 = vunpack.c.l.b16 %v727
        %v760 = vunpack.c.l.b16 %v728
        %v761 = vunpack.c.l.b16 %v729
        %v762 = vunpack.c.l.b16 %v730
        %v763 = vunpack.c.l.b16 %v731
        %v764 = vunpack.c.l.b16 %v732
        %v765 = vunpack.c.l.b16 %v733
        %v766 = vunpack.c.l.b16 %v734
        %v767 = vunpack.c.l.b16 %v735
        %v768 = vunpack.c.l.b16 %v736
        %v769 = vunpack.c.l.b16 %v737
        %v770 = vunpack.c.l.b16 %v738
        %v771 = vunpack.c.l.b16 %v739
        %v772 = vunpack.c.l.b16 %v740
        %v773 = vunpack.c.l.b16 %v741
        %v774 = vunpack.c.l.b16 %v742
        %v775 = vpack.c.b16 %v760, %v759
        %v776 = vpack.c.b16 %v762, %v761
        %v777 = vpack.c.b16 %v764, %v763
        %v778 = vpack.c.b16 %v766, %v765
        %v779 = vpack.c.b16 %v768, %v767
        %v780 = vpack.c.b16 %v770, %v769
        %v781 = vpack.c.b16 %v772, %v771
        %v782 = vpack.c.b16 %v774, %v773
        %791 = vmatpush.bf16.msra.mxu0 %v782
        %792 = vmatpush.bf16.msra.mxu0 %v781
        %793 = vmatpush.bf16.msra.mxu0 %v780
        %794 = vmatpush.bf16.msra.mxu0 %v779
        %795 = vmatpush.bf16.msra.mxu0 %v778
        %796 = vmatpush.bf16.msra.mxu0 %v777
        %797 = vmatpush.bf16.msra.mxu0 %v776
        %798 = vmatpush.bf16.msra.mxu0 %v775
        %799 = vmatmul.bf16.gmra.mxu0 %v720
        %v800 = vpop.f32.mrf.mxu0
        %v801 = vadd.f32 0.0, %v800
        %v802 = vpop.f32.mrf.mxu0
        %v803 = vadd.f32 0.0, %v802
        %804 = vdwg.mxu0
        %806 = vset.pattern.permute.xlu0 0
        %807 = vperm.xlu0 %806, %v723
        %v808 = vpop.permute.xlu0 %807
        %811 = vset.pattern.permute.xlu0 0
        %812 = vperm.xlu0 %811, %v724
        %v813 = vpop.permute.xlu0 %812
        %v815 = vperm.slane %v721, 0
        %v816 = vmul.f32 %v808, %v815
        %v817 = vmul.f32 %v813, %v815
        %v818 = vadd.f32 %v801, %v816
        %v819 = vadd.f32 %v803, %v817
        %v820 = vperm.slane %v721, 1
        %v821 = vadd.f32 %v818, %v820
        %v822 = vadd.f32 %v819, %v820
        %v823 = vld [vmem:[#allocation8] sm:$0xf]
        %v824 = vld [vmem:[#allocation8 + $0x4] sm:$0xf]
        %v825 = vld [vmem:[#allocation8 + $0x8] sm:$0xf]
        %v826 = vld [vmem:[#allocation8 + $0xc] sm:$0xf]
        %v827 = vld [vmem:[#allocation8 + $0x10] sm:$0xf]
        %v828 = vld [vmem:[#allocation8 + $0x14] sm:$0xf]
        %v829 = vld [vmem:[#allocation8 + $0x18] sm:$0xf]
        %v830 = vld [vmem:[#allocation8 + $0x1c] sm:$0xf]
        %v831 = vld [vmem:[#allocation8 + $0x20] sm:$0xf]
        %v832 = vld [vmem:[#allocation8 + $0x24] sm:$0xf]
        %v833 = vld [vmem:[#allocation8 + $0x28] sm:$0xf]
        %v834 = vld [vmem:[#allocation8 + $0x2c] sm:$0xf]
        %v835 = vld [vmem:[#allocation8 + $0x30] sm:$0xf]
        %v836 = vld [vmem:[#allocation8 + $0x34] sm:$0xf]
        %v837 = vld [vmem:[#allocation8 + $0x38] sm:$0xf]
        %v838 = vld [vmem:[#allocation8 + $0x3c] sm:$0xf]
        %v855 = vunpack.c.l.b16 %v823
        %v856 = vunpack.c.l.b16 %v824
        %v857 = vunpack.c.l.b16 %v825
        %v858 = vunpack.c.l.b16 %v826
        %v859 = vunpack.c.l.b16 %v827
        %v860 = vunpack.c.l.b16 %v828
        %v861 = vunpack.c.l.b16 %v829
        %v862 = vunpack.c.l.b16 %v830
        %v863 = vunpack.c.l.b16 %v831
        %v864 = vunpack.c.l.b16 %v832
        %v865 = vunpack.c.l.b16 %v833
        %v866 = vunpack.c.l.b16 %v834
        %v867 = vunpack.c.l.b16 %v835
        %v868 = vunpack.c.l.b16 %v836
        %v869 = vunpack.c.l.b16 %v837
        %v870 = vunpack.c.l.b16 %v838
        %v871 = vpack.c.b16 %v856, %v855
        %v872 = vpack.c.b16 %v858, %v857
        %v873 = vpack.c.b16 %v860, %v859
        %v874 = vpack.c.b16 %v862, %v861
        %v875 = vpack.c.b16 %v864, %v863
        %v876 = vpack.c.b16 %v866, %v865
        %v877 = vpack.c.b16 %v868, %v867
        %v878 = vpack.c.b16 %v870, %v869
        %887 = vmatpush.bf16.msra.mxu0 %v878
        %888 = vmatpush.bf16.msra.mxu0 %v877
        %889 = vmatpush.bf16.msra.mxu0 %v876
        %890 = vmatpush.bf16.msra.mxu0 %v875
        %891 = vmatpush.bf16.msra.mxu0 %v874
        %892 = vmatpush.bf16.msra.mxu0 %v873
        %893 = vmatpush.bf16.msra.mxu0 %v872
        %894 = vmatpush.bf16.msra.mxu0 %v871
        %895 = vmatmul.bf16.gmra.mxu0 %v720
        %v896 = vpop.f32.mrf.mxu0
        %v897 = vadd.f32 0.0, %v896
        %v898 = vpop.f32.mrf.mxu0
        %v899 = vadd.f32 0.0, %v898
        %900 = vdwg.mxu0
        %902 = vset.pattern.permute.xlu0 0
        %903 = vperm.xlu0 %902, %v725
        %v904 = vpop.permute.xlu0 %903
        %907 = vset.pattern.permute.xlu0 0
        %908 = vperm.xlu0 %907, %v726
        %v909 = vpop.permute.xlu0 %908
        %v911 = vperm.slane %v721, 2
        %v912 = vmul.f32 %v904, %v911
        %v913 = vmul.f32 %v909, %v911
        %v914 = vadd.f32 %v897, %v912
        %v915 = vadd.f32 %v899, %v913
        %v916 = vperm.slane %v721, 3
        %v917 = vadd.f32 %v914, %v916
        %v918 = vadd.f32 %v915, %v916
        %v919 = vld [vmem:[#allocation10] sm:$0xf]
        %v920 = vld [vmem:[#allocation10 + $0x4] sm:$0xf]
        %v921 = vld [vmem:[#allocation10 + $0x8] sm:$0xf]
        %v922 = vld [vmem:[#allocation10 + $0xc] sm:$0xf]
        %v923 = vld [vmem:[#allocation10 + $0x10] sm:$0xf]
        %v924 = vld [vmem:[#allocation10 + $0x14] sm:$0xf]
        %v925 = vld [vmem:[#allocation10 + $0x18] sm:$0xf]
        %v926 = vld [vmem:[#allocation10 + $0x1c] sm:$0xf]
        %v927 = vld [vmem:[#allocation10 + $0x20] sm:$0xf]
        %v928 = vld [vmem:[#allocation10 + $0x24] sm:$0xf]
        %v929 = vld [vmem:[#allocation10 + $0x28] sm:$0xf]
        %v930 = vld [vmem:[#allocation10 + $0x2c] sm:$0xf]
        %v931 = vld [vmem:[#allocation10 + $0x30] sm:$0xf]
        %v932 = vld [vmem:[#allocation10 + $0x34] sm:$0xf]
        %v933 = vld [vmem:[#allocation10 + $0x38] sm:$0xf]
        %v934 = vld [vmem:[#allocation10 + $0x3c] sm:$0xf]
        %v951 = vunpack.c.l.b16 %v919
        %v952 = vunpack.c.l.b16 %v920
        %v953 = vunpack.c.l.b16 %v921
        %v954 = vunpack.c.l.b16 %v922
        %v955 = vunpack.c.l.b16 %v923
        %v956 = vunpack.c.l.b16 %v924
        %v957 = vunpack.c.l.b16 %v925
        %v958 = vunpack.c.l.b16 %v926
        %v959 = vunpack.c.l.b16 %v927
        %v960 = vunpack.c.l.b16 %v928
        %v961 = vunpack.c.l.b16 %v929
        %v962 = vunpack.c.l.b16 %v930
        %v963 = vunpack.c.l.b16 %v931
        %v964 = vunpack.c.l.b16 %v932
        %v965 = vunpack.c.l.b16 %v933
        %v966 = vunpack.c.l.b16 %v934
        %v967 = vpack.c.b16 %v952, %v951
        %v968 = vpack.c.b16 %v954, %v953
        %v969 = vpack.c.b16 %v956, %v955
        %v970 = vpack.c.b16 %v958, %v957
        %v971 = vpack.c.b16 %v960, %v959
        %v972 = vpack.c.b16 %v962, %v961
        %v973 = vpack.c.b16 %v964, %v963
        %v974 = vpack.c.b16 %v966, %v965
        %983 = vmatpush.bf16.msra.mxu0 %v974
        %984 = vmatpush.bf16.msra.mxu0 %v973
        %985 = vmatpush.bf16.msra.mxu0 %v972
        %986 = vmatpush.bf16.msra.mxu0 %v971
        %987 = vmatpush.bf16.msra.mxu0 %v970
        %988 = vmatpush.bf16.msra.mxu0 %v969
        %989 = vmatpush.bf16.msra.mxu0 %v968
        %990 = vmatpush.bf16.msra.mxu0 %v967
        %991 = vmatmul.bf16.gmra.mxu0 %v720
        %v992 = vpop.f32.mrf.mxu0
        %v993 = vadd.f32 0.0, %v992
        %v994 = vpop.f32.mrf.mxu0
        %v995 = vadd.f32 0.0, %v994
        %996 = vdwg.mxu0
        %v997 = vperm.slane %v721, 4
        %v998 = vmul.f32 %v904, %v997
        %v999 = vmul.f32 %v909, %v997
        %v1000 = vadd.f32 %v993, %v998
        %v1001 = vadd.f32 %v995, %v999
        %v1002 = vperm.slane %v721, 5
        %v1003 = vadd.f32 %v1000, %v1002
        %v1004 = vadd.f32 %v1001, %v1002
        %v1005 = vpack.c.bf16 %v821, %v821
        %v1006 = vpack.c.bf16 %v822, %v822
        %v1007 = vpack.c.bf16 %v917, %v917
        %v1008 = vpack.c.bf16 %v918, %v918
        %v1009 = vld [vmem:[%s4] sm:$0xf]
        %v1010 = vunpack.c.l.bf16 %v1009
        %1011 = vmatpush.bf16.xpose.msra.mxu0 0
        %1012 = vmatpush.bf16.xpose.msra.mxu0 0
        %1013 = vmatpush.bf16.xpose.msra.mxu0 0
        %1014 = vmatpush.bf16.xpose.msra.mxu0 0
        %1015 = vmatpush.bf16.xpose.msra.mxu0 0
        %1016 = vmatpush.bf16.xpose.msra.mxu0 0
        %1017 = vmatpush.bf16.xpose.msra.mxu0 0
        %1018 = vmatpush.bf16.xpose.msra.mxu0 %v1007
        %1019 = vmatmul.bf16.gmra.mxu0 %v1005
        %v1020 = vpop.f32.mrf.mxu0
        %v1021 = vadd.f32 %v1010, %v1020
        %v1022 = vpop.f32.mrf.mxu0
        %1023 = vdwg.mxu0
        %1024 = vmatpush.bf16.xpose.msra.mxu0 0
        %1025 = vmatpush.bf16.xpose.msra.mxu0 0
        %1026 = vmatpush.bf16.xpose.msra.mxu0 0
        %1027 = vmatpush.bf16.xpose.msra.mxu0 0
        %1028 = vmatpush.bf16.xpose.msra.mxu0 0
        %1029 = vmatpush.bf16.xpose.msra.mxu0 0
        %1030 = vmatpush.bf16.xpose.msra.mxu0 0
        %1031 = vmatpush.bf16.xpose.msra.mxu0 %v1008
        %1032 = vmatmul.bf16.gmra.mxu0 %v1006
        %v1033 = vpop.f32.mrf.mxu0
        %v1034 = vadd.f32 %v1010, %v1033
        %v1035 = vpop.f32.mrf.mxu0
        %1036 = vdwg.mxu0
        %v1037 = vsel %vm642, %v1021, -inf
        %1038 = vmax.xlane.f32.xlu0 %v1037
        %v1039 = vpop.xlane.xlu0 %1038
        %v1040 = vsel %vm642, %v1034, -inf
        %1041 = vmax.xlane.f32.xlu0 %v1040
        %v1042 = vpop.xlane.xlu0 %1041
        %v1043 = vsub.f32 %v1021, %v1039
        %v1044 = vsub.f32 %v1034, %v1042
        %v1045 = vmul.f32 %v1043, 1.442695
        %v1046 = vpow.pop %v1045
        %v1047 = vmul.f32 %v1044, 1.442695
        %v1048 = vpow.pop %v1047
        %v1049 = vsel %vm642, %v1046, 0.0
        %1050 = vadd.xlane.f32.xlu0 %v1049
        %v1051 = vpop.xlane.xlu0 %1050
        %v1052 = vsel %vm642, %v1048, 0.0
        %1053 = vadd.xlane.f32.xlu0 %v1052
        %v1054 = vpop.xlane.xlu0 %1053
        %v1055 = vrcp.pop %v1051
        %v1056 = vrcp.pop %v1054
        %v1057 = vmul.f32 %v1046, %v1055
        %v1058 = vmul.f32 %v1048, %v1056
        %v1059 = vpack.c.bf16 %v1057, %v1057
        %v1060 = vpack.c.bf16 %v1058, %v1058
        %v1061 = vpack.c.bf16 %v1003, %v1003
        %v1062 = vpack.c.bf16 %v1004, %v1004
        %v1064 = vsel %vm642, %v1059, 0
        %v1067 = vsel %vm646, %v1061, 0
        %1069 = vmatpush.bf16.msra.mxu0 0
        %1070 = vmatpush.bf16.msra.mxu0 0
        %1071 = vmatpush.bf16.msra.mxu0 0
        %1072 = vmatpush.bf16.msra.mxu0 0
        %1073 = vmatpush.bf16.msra.mxu0 0
        %1074 = vmatpush.bf16.msra.mxu0 0
        %1075 = vmatpush.bf16.msra.mxu0 0
        %1076 = vmatpush.bf16.msra.mxu0 %v1067
        %1077 = vmatmul.bf16.gmra.mxu0 %v1064
        %v1078 = vpop.f32.mrf.mxu0
        %v1079 = vadd.f32 0.0, %v1078
        %v1080 = vpop.f32.mrf.mxu0
        %1081 = vdwg.mxu0
        %v1083 = vsel %vm642, %v1060, 0
        %v1086 = vsel %vm646, %v1062, 0
        %1088 = vmatpush.bf16.msra.mxu0 0
        %1089 = vmatpush.bf16.msra.mxu0 0
        %1090 = vmatpush.bf16.msra.mxu0 0
        %1091 = vmatpush.bf16.msra.mxu0 0
        %1092 = vmatpush.bf16.msra.mxu0 0
        %1093 = vmatpush.bf16.msra.mxu0 0
        %1094 = vmatpush.bf16.msra.mxu0 0
        %1095 = vmatpush.bf16.msra.mxu0 %v1086
        %1096 = vmatmul.bf16.gmra.mxu0 %v1083
        %v1097 = vpop.f32.mrf.mxu0
        %v1098 = vadd.f32 0.0, %v1097
        %v1099 = vpop.f32.mrf.mxu0
        %1100 = vdwg.mxu0
        %v1101 = vpack.c.bf16 %v1098, %v1079
        %v1102 = vld [vmem:[#allocation11] sm:$0xf]
        %v1103 = vld [vmem:[#allocation11 + $0x4] sm:$0xf]
        %v1104 = vld [vmem:[#allocation11 + $0x8] sm:$0xf]
        %v1105 = vld [vmem:[#allocation11 + $0xc] sm:$0xf]
        %v1106 = vld [vmem:[#allocation11 + $0x10] sm:$0xf]
        %v1107 = vld [vmem:[#allocation11 + $0x14] sm:$0xf]
        %v1108 = vld [vmem:[#allocation11 + $0x18] sm:$0xf]
        %v1109 = vld [vmem:[#allocation11 + $0x1c] sm:$0xf]
        %v1110 = vld [vmem:[#allocation11 + $0x20] sm:$0xf]
        %v1111 = vld [vmem:[#allocation11 + $0x24] sm:$0xf]
        %v1112 = vld [vmem:[#allocation11 + $0x28] sm:$0xf]
        %v1113 = vld [vmem:[#allocation11 + $0x2c] sm:$0xf]
        %v1114 = vld [vmem:[#allocation11 + $0x30] sm:$0xf]
        %v1115 = vld [vmem:[#allocation11 + $0x34] sm:$0xf]
        %v1116 = vld [vmem:[#allocation11 + $0x38] sm:$0xf]
        %v1117 = vld [vmem:[#allocation11 + $0x3c] sm:$0xf]
        %v1118 = vperm.slane %v721, 6
        %v1135 = vunpack.c.l.b16 %v1102
        %v1136 = vunpack.c.l.b16 %v1103
        %v1137 = vunpack.c.l.b16 %v1104
        %v1138 = vunpack.c.l.b16 %v1105
        %v1139 = vunpack.c.l.b16 %v1106
        %v1140 = vunpack.c.l.b16 %v1107
        %v1141 = vunpack.c.l.b16 %v1108
        %v1142 = vunpack.c.l.b16 %v1109
        %v1143 = vunpack.c.l.b16 %v1110
        %v1144 = vunpack.c.l.b16 %v1111
        %v1145 = vunpack.c.l.b16 %v1112
        %v1146 = vunpack.c.l.b16 %v1113
        %v1147 = vunpack.c.l.b16 %v1114
        %v1148 = vunpack.c.l.b16 %v1115
        %v1149 = vunpack.c.l.b16 %v1116
        %v1150 = vunpack.c.l.b16 %v1117
        %v1151 = vpack.c.b16 %v1136, %v1135
        %v1152 = vpack.c.b16 %v1138, %v1137
        %v1153 = vpack.c.b16 %v1140, %v1139
        %v1154 = vpack.c.b16 %v1142, %v1141
        %v1155 = vpack.c.b16 %v1144, %v1143
        %v1156 = vpack.c.b16 %v1146, %v1145
        %v1157 = vpack.c.b16 %v1148, %v1147
        %v1158 = vpack.c.b16 %v1150, %v1149
        %1167 = vmatpush.bf16.msra.mxu0 %v1158
        %1168 = vmatpush.bf16.msra.mxu0 %v1157
        %1169 = vmatpush.bf16.msra.mxu0 %v1156
        %1170 = vmatpush.bf16.msra.mxu0 %v1155
        %1171 = vmatpush.bf16.msra.mxu0 %v1154
        %1172 = vmatpush.bf16.msra.mxu0 %v1153
        %1173 = vmatpush.bf16.msra.mxu0 %v1152
        %1174 = vmatpush.bf16.msra.mxu0 %v1151
        %1175 = vmatmul.bf16.gmra.mxu0 %v1101
        %v1176 = vpop.f32.mrf.mxu0
        %v1177 = vadd.f32 %v1118, %v1176
        %v1178 = vpop.f32.mrf.mxu0
        %v1179 = vadd.f32 %v1118, %v1178
        %1180 = vdwg.mxu0
        %v1181 = vadd.f32 %v1003, %v1177
        %v1182 = vadd.f32 %v1004, %v1179
        %1183 = vadd.xlane.f32.xlu0 %v1181
        %v1184 = vpop.xlane.xlu0 %1183
        %1185 = vadd.xlane.f32.xlu0 %v1182
        %v1186 = vpop.xlane.xlu0 %1185
        %v1187 = vmul.f32 %v1184, 0.03125
        %v1188 = vmul.f32 %v1186, 0.03125
        %v1189 = vmul.f32 %v1181, %v1181
        %v1190 = vmul.f32 %v1182, %v1182
        %1191 = vadd.xlane.f32.xlu0 %v1189
        %v1192 = vpop.xlane.xlu0 %1191
        %1193 = vadd.xlane.f32.xlu0 %v1190
        %v1194 = vpop.xlane.xlu0 %1193
        %v1195 = vmul.f32 %v1192, 0.03125
        %v1196 = vmul.f32 %v1194, 0.03125
        %v1197 = vmul.f32 %v1187, %v1187
        %v1198 = vmul.f32 %v1188, %v1188
        %v1199 = vsub.f32 %v1195, %v1197
        %v1200 = vsub.f32 %v1196, %v1198
        %v1201 = vmax.f32 %v1199, 0.0
        %v1202 = vmax.f32 %v1200, 0.0
        %v1203 = vsub.f32 %v1181, %v1187
        %v1204 = vsub.f32 %v1182, %v1188
        %v1205 = vadd.f32 %v1201, 1e-06
        %v1206 = vadd.f32 %v1202, 1e-06
        %v1207 = vrsqrt.pop %v1205
        %v1208 = vmul.f32 %v1207, %v1205
        %v1209 = vmul.f32 %v1208, %v1207
        %v1210 = vmul.f32 0.5, %v1209
        %v1211 = vsub.f32 1.5, %v1210
        %v1212 = vmul.f32 %v1207, %v1211
        %vm1213 = vweird.f32 %v1205
        %vm1214 = vweird.f32 %v1207
        %vm1215 = vmor %vm1213, %vm1214
        %v1216 = vsel %vm1215, %v1207, %v1212
        %v1217 = vrsqrt.pop %v1206
        %v1218 = vmul.f32 %v1217, %v1206
        %v1219 = vmul.f32 %v1218, %v1217
        %v1220 = vmul.f32 0.5, %v1219
        %v1221 = vsub.f32 1.5, %v1220
        %v1222 = vmul.f32 %v1217, %v1221
        %vm1223 = vweird.f32 %v1206
        %vm1224 = vweird.f32 %v1217
        %vm1225 = vmor %vm1223, %vm1224
        %v1226 = vsel %vm1225, %v1217, %v1222
        %v1227 = vmul.f32 %v1203, %v1216
        %v1228 = vmul.f32 %v1204, %v1226
        %v1229 = vperm.slane %v722, 0
        %v1230 = vmul.f32 %v1227, %v1229
        %v1231 = vmul.f32 %v1228, %v1229
        %v1232 = vperm.slane %v722, 1
        %v1233 = vadd.f32 %v1230, %v1232
        %v1234 = vadd.f32 %v1231, %v1232
        %v1235 = vpack.c.bf16 %v1234, %v1233
        %v1236 = vld [vmem:[#allocation13] sm:$0xf]
        %v1237 = vld [vmem:[#allocation13 + $0x4] sm:$0xf]
        %v1238 = vld [vmem:[#allocation13 + $0x8] sm:$0xf]
        %v1239 = vld [vmem:[#allocation13 + $0xc] sm:$0xf]
        %v1240 = vld [vmem:[#allocation13 + $0x10] sm:$0xf]
        %v1241 = vld [vmem:[#allocation13 + $0x14] sm:$0xf]
        %v1242 = vld [vmem:[#allocation13 + $0x18] sm:$0xf]
        %v1243 = vld [vmem:[#allocation13 + $0x1c] sm:$0xf]
        %v1244 = vld [vmem:[#allocation13 + $0x20] sm:$0xf]
        %v1245 = vld [vmem:[#allocation13 + $0x24] sm:$0xf]
        %v1246 = vld [vmem:[#allocation13 + $0x28] sm:$0xf]
        %v1247 = vld [vmem:[#allocation13 + $0x2c] sm:$0xf]
        %v1248 = vld [vmem:[#allocation13 + $0x30] sm:$0xf]
        %v1249 = vld [vmem:[#allocation13 + $0x34] sm:$0xf]
        %v1250 = vld [vmem:[#allocation13 + $0x38] sm:$0xf]
        %v1251 = vld [vmem:[#allocation13 + $0x3c] sm:$0xf]
        %v1252 = vld [vmem:[%s14] sm:$0x1]
        %v1254 = vperm.slane %v1252, 0
        %v1272 = vunpack.c.l.b16 %v1236
        %v1273 = vunpack.c.l.b16 %v1237
        %v1274 = vunpack.c.l.b16 %v1238
        %v1275 = vunpack.c.l.b16 %v1239
        %v1276 = vunpack.c.l.b16 %v1240
        %v1277 = vunpack.c.l.b16 %v1241
        %v1278 = vunpack.c.l.b16 %v1242
        %v1279 = vunpack.c.l.b16 %v1243
        %v1280 = vunpack.c.l.b16 %v1244
        %v1281 = vunpack.c.l.b16 %v1245
        %v1282 = vunpack.c.l.b16 %v1246
        %v1283 = vunpack.c.l.b16 %v1247
        %v1284 = vunpack.c.l.b16 %v1248
        %v1285 = vunpack.c.l.b16 %v1249
        %v1286 = vunpack.c.l.b16 %v1250
        %v1287 = vunpack.c.l.b16 %v1251
        %v1288 = vpack.c.b16 %v1273, %v1272
        %v1289 = vpack.c.b16 %v1275, %v1274
        %v1290 = vpack.c.b16 %v1277, %v1276
        %v1291 = vpack.c.b16 %v1279, %v1278
        %v1292 = vpack.c.b16 %v1281, %v1280
        %v1293 = vpack.c.b16 %v1283, %v1282
        %v1294 = vpack.c.b16 %v1285, %v1284
        %v1295 = vpack.c.b16 %v1287, %v1286
        %1304 = vmatpush.bf16.msra.mxu0 %v1295
        %1305 = vmatpush.bf16.msra.mxu0 %v1294
        %1306 = vmatpush.bf16.msra.mxu0 %v1293
        %1307 = vmatpush.bf16.msra.mxu0 %v1292
        %1308 = vmatpush.bf16.msra.mxu0 %v1291
        %1309 = vmatpush.bf16.msra.mxu0 %v1290
        %1310 = vmatpush.bf16.msra.mxu0 %v1289
        %1311 = vmatpush.bf16.msra.mxu0 %v1288
        %1312 = vmatmul.bf16.gmra.mxu0 %v1235
        %v1313 = vpop.f32.mrf.mxu0
        %v1314 = vadd.f32 %v1254, %v1313
        %v1315 = vpop.f32.mrf.mxu0
        %v1316 = vadd.f32 %v1254, %v1315
        %1317 = vdwg.mxu0
        %s1318 = sld [smem:[#allocation4 + %s44]]
        %p1319 = scmp.eq.s32.totalorder %s1318, 0
        %s1320 = scalar_select %p1319, 1, 0
        %s1321 = scvt.s32.f32 %s1320
        %p1322 = scmp.eq.s32.totalorder %s1318, 1
        %s1323 = scalar_select %p1322, 1, 0
        %s1324 = scvt.s32.f32 %s1323
        %p1325 = scmp.eq.s32.totalorder %s1318, 2
        %s1326 = scalar_select %p1325, 1, 0
        %s1327 = scvt.s32.f32 %s1326
        %v1328 = vmax.f32 %v1314, 0.0
        %v1329 = vmax.f32 %v1316, 0.0
        %v1330 = vstv %s1321
        %v1331 = vmul.f32 %v1330, %v1328
        %v1332 = vmul.f32 %v1330, %v1329
        %v1333 = vmul.f32 %v1314, %v1314
        %v1334 = vmul.f32 %v1316, %v1316
        %v1335 = vmul.f32 %v1314, %v1333
        %v1336 = vmul.f32 %v1316, %v1334
        %v1337 = vmul.f32 %v1335, 0.044715
        %v1338 = vmul.f32 %v1336, 0.044715
        %v1339 = vadd.f32 %v1314, %v1337
        %v1340 = vadd.f32 %v1316, %v1338
        %v1341 = vmul.f32 %v1339, 0.7978846
        %v1342 = vmul.f32 %v1340, 0.7978846
        %v1343 = vtanh.pop %v1341
        %v1344 = vtanh.pop %v1342
        %v1345 = vadd.f32 %v1343, 1.0
        %v1346 = vadd.f32 %v1344, 1.0
        %v1347 = vmul.f32 %v1345, 0.5
        %v1348 = vmul.f32 %v1346, 0.5
        %v1349 = vmul.f32 %v1314, %v1347
        %v1350 = vmul.f32 %v1316, %v1348
        %v1351 = vstv %s1324
        %v1352 = vmul.f32 %v1351, %v1349
        %v1353 = vmul.f32 %v1351, %v1350
        %v1354 = vadd.f32 %v1331, %v1352
        %v1355 = vadd.f32 %v1332, %v1353
        %v1356 = vtanh.pop %v1314
        %v1357 = vtanh.pop %v1316
        %v1358 = vstv %s1327
        %v1359 = vmul.f32 %v1358, %v1356
        %v1360 = vmul.f32 %v1358, %v1357
        %v1361 = vadd.f32 %v1354, %v1359
        %v1362 = vadd.f32 %v1355, %v1360
        %v1363 = vpack.c.bf16 %v1362, %v1361
        %v1364 = vld [vmem:[#allocation14] sm:$0xf]
        %v1365 = vld [vmem:[#allocation14 + $0x4] sm:$0xf]
        %v1366 = vld [vmem:[#allocation14 + $0x8] sm:$0xf]
        %v1367 = vld [vmem:[#allocation14 + $0xc] sm:$0xf]
        %v1368 = vld [vmem:[#allocation14 + $0x10] sm:$0xf]
        %v1369 = vld [vmem:[#allocation14 + $0x14] sm:$0xf]
        %v1370 = vld [vmem:[#allocation14 + $0x18] sm:$0xf]
        %v1371 = vld [vmem:[#allocation14 + $0x1c] sm:$0xf]
        %v1372 = vld [vmem:[#allocation14 + $0x20] sm:$0xf]
        %v1373 = vld [vmem:[#allocation14 + $0x24] sm:$0xf]
        %v1374 = vld [vmem:[#allocation14 + $0x28] sm:$0xf]
        %v1375 = vld [vmem:[#allocation14 + $0x2c] sm:$0xf]
        %v1376 = vld [vmem:[#allocation14 + $0x30] sm:$0xf]
        %v1377 = vld [vmem:[#allocation14 + $0x34] sm:$0xf]
        %v1378 = vld [vmem:[#allocation14 + $0x38] sm:$0xf]
        %v1379 = vld [vmem:[#allocation14 + $0x3c] sm:$0xf]
        %v1380 = vperm.slane %v721, 7
        %v1397 = vunpack.c.l.b16 %v1364
        %v1398 = vunpack.c.l.b16 %v1365
        %v1399 = vunpack.c.l.b16 %v1366
        %v1400 = vunpack.c.l.b16 %v1367
        %v1401 = vunpack.c.l.b16 %v1368
        %v1402 = vunpack.c.l.b16 %v1369
        %v1403 = vunpack.c.l.b16 %v1370
        %v1404 = vunpack.c.l.b16 %v1371
        %v1405 = vunpack.c.l.b16 %v1372
        %v1406 = vunpack.c.l.b16 %v1373
        %v1407 = vunpack.c.l.b16 %v1374
        %v1408 = vunpack.c.l.b16 %v1375
        %v1409 = vunpack.c.l.b16 %v1376
        %v1410 = vunpack.c.l.b16 %v1377
        %v1411 = vunpack.c.l.b16 %v1378
        %v1412 = vunpack.c.l.b16 %v1379
        %v1413 = vpack.c.b16 %v1398, %v1397
        %v1414 = vpack.c.b16 %v1400, %v1399
        %v1415 = vpack.c.b16 %v1402, %v1401
        %v1416 = vpack.c.b16 %v1404, %v1403
        %v1417 = vpack.c.b16 %v1406, %v1405
        %v1418 = vpack.c.b16 %v1408, %v1407
        %v1419 = vpack.c.b16 %v1410, %v1409
        %v1420 = vpack.c.b16 %v1412, %v1411
        %1429 = vmatpush.bf16.msra.mxu0 %v1420
        %1430 = vmatpush.bf16.msra.mxu0 %v1419
        %1431 = vmatpush.bf16.msra.mxu0 %v1418
        %1432 = vmatpush.bf16.msra.mxu0 %v1417
        %1433 = vmatpush.bf16.msra.mxu0 %v1416
        %1434 = vmatpush.bf16.msra.mxu0 %v1415
        %1435 = vmatpush.bf16.msra.mxu0 %v1414
        %1436 = vmatpush.bf16.msra.mxu0 %v1413
        %1437 = vmatmul.bf16.gmra.mxu0 %v1363
        %v1438 = vpop.f32.mrf.mxu0
        %v1439 = vadd.f32 %v1380, %v1438
        %v1440 = vpop.f32.mrf.mxu0
        %v1441 = vadd.f32 %v1380, %v1440
        %1442 = vdwg.mxu0
        %v1443 = vadd.f32 %v1233, %v1439
        %v1444 = vadd.f32 %v1234, %v1441
        %1445 = vadd.xlane.f32.xlu0 %v1443
        %v1446 = vpop.xlane.xlu0 %1445
        %1447 = vadd.xlane.f32.xlu0 %v1444
        %v1448 = vpop.xlane.xlu0 %1447
        %v1449 = vmul.f32 %v1446, 0.03125
        %v1450 = vmul.f32 %v1448, 0.03125
        %v1451 = vmul.f32 %v1443, %v1443
        %v1452 = vmul.f32 %v1444, %v1444
        %1453 = vadd.xlane.f32.xlu0 %v1451
        %v1454 = vpop.xlane.xlu0 %1453
        %1455 = vadd.xlane.f32.xlu0 %v1452
        %v1456 = vpop.xlane.xlu0 %1455
        %v1457 = vmul.f32 %v1454, 0.03125
        %v1458 = vmul.f32 %v1456, 0.03125
        %v1459 = vmul.f32 %v1449, %v1449
        %v1460 = vmul.f32 %v1450, %v1450
        %v1461 = vsub.f32 %v1457, %v1459
        %v1462 = vsub.f32 %v1458, %v1460
        %v1463 = vmax.f32 %v1461, 0.0
        %v1464 = vmax.f32 %v1462, 0.0
        %v1465 = vsub.f32 %v1443, %v1449
        %v1466 = vsub.f32 %v1444, %v1450
        %v1467 = vadd.f32 %v1463, 1e-06
        %v1468 = vadd.f32 %v1464, 1e-06
        %v1469 = vrsqrt.pop %v1467
        %v1470 = vmul.f32 %v1469, %v1467
        %v1471 = vmul.f32 %v1470, %v1469
        %v1472 = vmul.f32 0.5, %v1471
        %v1473 = vsub.f32 1.5, %v1472
        %v1474 = vmul.f32 %v1469, %v1473
        %vm1475 = vweird.f32 %v1467
        %vm1476 = vweird.f32 %v1469
        %vm1477 = vmor %vm1475, %vm1476
        %v1478 = vsel %vm1477, %v1469, %v1474
        %v1479 = vrsqrt.pop %v1468
        %v1480 = vmul.f32 %v1479, %v1468
        %v1481 = vmul.f32 %v1480, %v1479
        %v1482 = vmul.f32 0.5, %v1481
        %v1483 = vsub.f32 1.5, %v1482
        %v1484 = vmul.f32 %v1479, %v1483
        %vm1485 = vweird.f32 %v1468
        %vm1486 = vweird.f32 %v1479
        %vm1487 = vmor %vm1485, %vm1486
        %v1488 = vsel %vm1487, %v1479, %v1484
        %v1489 = vmul.f32 %v1465, %v1478
        %v1490 = vmul.f32 %v1466, %v1488
        %v1491 = vperm.slane %v722, 2
        %v1492 = vmul.f32 %v1489, %v1491
        %v1493 = vmul.f32 %v1490, %v1491
        %v1494 = vperm.slane %v722, 3
        %v1495 = vadd.f32 %v1492, %v1494
        %v1496 = vadd.f32 %v1493, %v1494
        %1497 = vst [vmem:[#allocation2] sm:$0xff] %v1495
        %1498 = vst [vmem:[#allocation2 + $0x8] sm:$0xff] %v1496
        %p1499 = scmp.eq.s32.totalorder %s44, 1
        // Predicated region
        $region105: #{tpu_custom_call.1} parent=75 // pred_check
          %p1500 = pneg %p1499
        $region106: #{tpu_custom_call.1} parent=75 // pred_check_branch
          %1502 = sbr.rel (%p1500) target = $region108
        $region107: #{tpu_custom_call.1} parent=75 // pred_region
          %1503 = vst [vmem:[#allocation16] sm:$0xff] %v1495
          %1504 = vst [vmem:[#allocation16 + $0x8] sm:$0xff] %v1496
        $region108: #{tpu_custom_call.1} parent=75 // pred_fallthru
          _
        // Predicated region
        $region109: #{tpu_custom_call.1} parent=75 // pred_check
          %p1505 = pneg %p378
        $region110: #{tpu_custom_call.1} parent=75 // pred_check_branch
          %1507 = sbr.rel (%p1505) target = $region112
        $region111: #{tpu_custom_call.1} parent=75 // pred_region
          %s1508 = smul.u32 2, %s43
          %1510 = vsyncadd [#allocation7], 0
          %s1511 = smul.addr %s1508, 8
          %s1512 = scalar_lea.hbm %s15, %s1511
          %s1513 = sshll.u32 [#allocation16], 4
          %s1514 = int_to_ptr.vmem [resolvable:$true] %s1513
          %s1515 = sshll.u32 %s1512, 4
          %s1516 = int_to_ptr.hbm [resolvable:$true] %s1515
          %1521 = dma.vmem_to_hbm [thread:$0]  %s1514, 256, %s1516, [#allocation7], 128, 128, 8
        $region112: #{tpu_custom_call.1} parent=75 // pred_fallthru
          _
        // Predicated region
        $region113: #{tpu_custom_call.1} parent=75 // pred_check
          %p1522 = pneg %p378
        $region114: #{tpu_custom_call.1} parent=75 // pred_check_branch
          %1524 = sbr.rel (%p1522) target = $region116
        $region115: #{tpu_custom_call.1} parent=75 // pred_region
          %1526 = dma.done [#allocation7], 256
        $region116: #{tpu_custom_call.1} parent=75 // pred_fallthru
          _
      $region76: #{tpu_custom_call.1} parent=5 // pred_fallthru
        _
      %p1527 = scmp.le.s32.totalorder 2, %s34
      // Predicated region
      $region117: #{tpu_custom_call.1} parent=5 // pred_check
        %p1528 = pneg %p1527
      $region118: #{tpu_custom_call.1} parent=5 // pred_check_branch
        %1530 = sbr.rel (%p1528) target = $region120
      $region119: #{tpu_custom_call.1} parent=5 // pred_region
        %s1531 = ssub.s32 %s34, 2
      $region120: #{tpu_custom_call.1} parent=5 // pred_fallthru
        _
    $region6: #{tpu_custom_call.1} parent=1 // loop_footer
      %s38 = sadd.s32 1, %s34
    $region7: #{tpu_custom_call.1} parent=1 // loop_footer_branch
      %33 = sbr.rel target = $region3
    $region8: #{tpu_custom_call.1} parent=1 // loop_exit
      _
    %1532 = vsyncpa [#allocation6], 1
    %s1533 = scalar_lea.sflag [#allocation6], 1
    %1534 = vsyncpa %s1533, 1
    %1535 = vsyncpa [#allocation9], 1
    %1536 = vsyncpa [#allocation12], 1
    %1537 = vsyncpa [#allocation15], 1
    %1538 = vsyncpa [#allocation7], 1
    %s1539 = scalar_lea.sflag [#allocation7], 1
    %1540 = vsyncpa %s1539, 1

</llo_original>
